<compile_context>
chip_gen: v7x
topology: tpu7x:2x2x1
jax: 0.10.0
libtpu: 0.0.40
codegen_flags: <defaults>
</compile_context>

<pallas_src>
import jax
import jax.numpy as jnp
from jax import lax
from jax.experimental import pallas as pl
from jax.experimental.pallas import tpu as pltpu


def _darknet_tiny_block_kernel(x_ref, w_ref, scale_ref, bias_ref, o_ref, xpad_ref):
    """One batch element per grid step.

    x_ref:     (1, H, W, Cin)        un-padded NHWC input tile (f32)
    w_ref:     (9*Cin, Cout)         conv weights, bf16, K ordered (dy, dx, ci)
    scale_ref: (1, Cout)             folded BN scale = gamma / sqrt(var + eps)
    bias_ref:  (1, Cout)             folded BN bias  = beta - mean * scale
    o_ref:     (1, H//2, W//2, Cout) pooled output (f32)
    xpad_ref:  (H+2, W+2, Cin)       f32 VMEM scratch holding the zero-padded tile
    """
    _, h, w, cin = x_ref.shape
    cout = o_ref.shape[3]
    ho, wo = h // 2, w // 2

    # ---- halo / zero padding in VMEM (replaces wrapper-side jnp.pad).
    xpad_ref[...] = jnp.zeros_like(xpad_ref)
    xpad_ref[1:h + 1, 1:w + 1, :] = x_ref[0]

    # ---- im2col: one (H*W, 9*Cin) patch matrix -> a single MXU matmul with
    #      K = 9*Cin instead of 9 K=Cin matmuls + 8 full-size accumulate passes.
    slabs = [xpad_ref[dy:dy + h, dx:dx + w, :]            # 9 x (H, W, Cin)
             for dy in range(3) for dx in range(3)]
    patches = jnp.concatenate(slabs, axis=-1)             # (H, W, 9*Cin)
    patches = patches.reshape(h * w, 9 * cin)             # leading-dim merge (cheap)

    acc = jnp.dot(patches.astype(jnp.bfloat16), w_ref[...],
                  preferred_element_type=jnp.float32)     # (H*W, Cout), f32 accum

    # ---- BatchNorm (folded, inference) + LeakyReLU(0.1): pure VPU work.
    z = acc * scale_ref[...] + bias_ref[...]
    z = jnp.maximum(z, 0.1 * z)

    # ---- MaxPool 2x2 / stride 2 as two pairwise maximum passes.
    z = z.reshape(ho, 2, w, cout)
    z = jnp.maximum(z[:, 0], z[:, 1])                     # pool rows    -> (Ho, W, Cout)
    z = z.reshape(ho, wo, 2, cout)
    z = jnp.maximum(z[:, :, 0], z[:, :, 1])               # pool columns -> (Ho, Wo, Cout)

    o_ref[0] = z.astype(o_ref.dtype)


@jax.jit
def darknet_tiny_block(x_nchw, w_oihw, gamma, beta, run_mean, run_var):
    """DarknetTinyBlock forward. Input/output in NCHW (PyTorch layout)."""
    eps = 1e-5
    n, cin, h, w = x_nchw.shape
    cout, cin_w, kh, kw = w_oihw.shape
    assert (kh, kw) == (3, 3) and cin_w == cin
    assert h % 2 == 0 and w % 2 == 0, "MaxPool2d(2,2) path assumes even H, W"
    ho, wo = h // 2, w // 2

    # Fold BatchNorm (inference form) into a per-channel scale / bias.
    scale = (gamma * lax.rsqrt(run_var + eps)).astype(jnp.float32)
    bias = (beta - run_mean * scale).astype(jnp.float32)

    # NCHW -> NHWC.  TODO(synk): keep activations NHWC end-to-end in a full
    # network so this boundary transpose (a full HBM pass) disappears.
    x_nhwc = jnp.transpose(x_nchw, (0, 2, 3, 1))

    # OIHW -> rows ordered (dy, dx, ci) x cols co == (9*Cin, Cout); cast once
    # to bf16 so the MXU runs at full rate (accumulation stays f32 in-kernel).
    w_kc = (jnp.transpose(w_oihw, (2, 3, 1, 0))
            .reshape(9 * cin, cout).astype(jnp.bfloat16))

    out_nhwc = pl.pallas_call(
        _darknet_tiny_block_kernel,
        out_shape=jax.ShapeDtypeStruct((n, ho, wo, cout), jnp.float32),
        grid=(n,),
        in_specs=[
            pl.BlockSpec((1, h, w, cin), lambda b: (b, 0, 0, 0)),
            pl.BlockSpec((9 * cin, cout), lambda b: (0, 0)),
            pl.BlockSpec((1, cout), lambda b: (0, 0)),
            pl.BlockSpec((1, cout), lambda b: (0, 0)),
        ],
        out_specs=pl.BlockSpec((1, ho, wo, cout), lambda b: (b, 0, 0, 0)),
        scratch_shapes=[pltpu.VMEM((h + 2, w + 2, cin), jnp.float32)],
        compiler_params=pltpu.CompilerParams(
            dimension_semantics=("parallel",),
            vmem_limit_bytes=32 * 1024 * 1024),
    )(x_nhwc, w_kc, scale.reshape(1, cout), bias.reshape(1, cout))

    # NHWC -> NCHW
    return jnp.transpose(out_nhwc, (0, 3, 1, 2))


def _reference(x_nchw, w_oihw, gamma, beta, run_mean, run_var):
    eps = 1e-5
    conv = lax.conv_general_dilated(
        x_nchw, w_oihw, window_strides=(1, 1), padding="SAME",
        dimension_numbers=("NCHW", "OIHW", "NCHW"))
    scale = gamma * lax.rsqrt(run_var + eps)
    bias = beta - run_mean * scale
    z = conv * scale[None, :, None, None] + bias[None, :, None, None]
    z = jnp.where(z > 0, z, 0.1 * z)
    return lax.reduce_window(z, -jnp.inf, lax.max,
                             (1, 1, 2, 2), (1, 1, 2, 2), "VALID")


if __name__ == "__main__":
    key = jax.random.PRNGKey(0)
    N, CIN, H, W = 2, 4, 16, 16
    FILTERS = 8

    kx, kw = jax.random.split(key)
    x = jax.random.normal(kx, (N, CIN, H, W), dtype=jnp.float32)

    # Deterministic synthetic parameters (not a checkpoint load).
    w = 0.1 * jax.random.normal(kw, (FILTERS, CIN, 3, 3), dtype=jnp.float32)
    gamma = jnp.linspace(0.5, 1.5, FILTERS, dtype=jnp.float32)
    beta = jnp.linspace(-0.2, 0.2, FILTERS, dtype=jnp.float32)
    run_mean = jnp.linspace(-0.1, 0.1, FILTERS, dtype=jnp.float32)
    run_var = jnp.linspace(0.5, 1.0, FILTERS, dtype=jnp.float32)

    out = darknet_tiny_block(x, w, gamma, beta, run_mean, run_var)
    out = jax.block_until_ready(out)

    ref = _reference(x, w, gamma, beta, run_mean, run_var)
    assert out.shape == (N, FILTERS, H // 2, W // 2), out.shape
    # bf16 MXU operands (f32 accumulation) -> compare against the f32 reference
    # with a correspondingly looser tolerance.
    max_err = float(jnp.max(jnp.abs(out - ref)))
    assert jnp.allclose(out, ref, atol=3e-2, rtol=3e-2), max_err

    print("KERNEL_OK")
</pallas_src>

<mosaic_0001>
module attributes {stable_mosaic.version = 11 : i64} {
  func.func @_darknet_tiny_block_kernel(%arg0: i32, %arg1: memref<1x16x16x4xf32, #tpu.memory_space<vmem>>, %arg2: memref<36x8xbf16, #tpu.memory_space<vmem>>, %arg3: memref<1x8xf32, #tpu.memory_space<vmem>>, %arg4: memref<1x8xf32, #tpu.memory_space<vmem>>, %arg5: memref<1x8x8x8xf32, #tpu.memory_space<vmem>>, %arg6: memref<18x18x4xf32, #tpu.memory_space<vmem>>) attributes {dimension_semantics = [#tpu.dimension_semantics<parallel>], iteration_bounds = array<i64: 2>, scalar_prefetch = 0 : i64, scratch_operands = 1 : i64, tpu.core_type = #tpu.core_type<tc>, window_params = [{transform_indices = @transform_0, window_bounds = array<i64: 1, 16, 16, 4>}, {pipeline_mode = #tpu.pipeline_mode<synchronous>, transform_indices = @transform_1, window_bounds = array<i64: 36, 8>}, {pipeline_mode = #tpu.pipeline_mode<synchronous>, transform_indices = @transform_2, window_bounds = array<i64: 1, 8>}, {pipeline_mode = #tpu.pipeline_mode<synchronous>, transform_indices = @transform_3, window_bounds = array<i64: 1, 8>}, {transform_indices = @transform_4, window_bounds = array<i64: 1, 8, 8, 8>}]} {
    %cst = arith.constant 0.000000e+00 : f32
    %0 = vector.broadcast %cst : f32 to vector<18x18x4xf32>
    %c0 = arith.constant 0 : index
    %c0_0 = arith.constant 0 : index
    %c0_1 = arith.constant 0 : index
    %1 = vector.load %arg6[%c0, %c0_0, %c0_1] : memref<18x18x4xf32, #tpu.memory_space<vmem>>, vector<18x18x4xf32>
    tpu.vector_store %arg6[%c0, %c0_0, %c0_1], %0 {strides = array<i32>} : memref<18x18x4xf32, #tpu.memory_space<vmem>>, vector<18x18x4xf32>,
    %c0_2 = arith.constant 0 : index
    %c0_3 = arith.constant 0 : index
    %c0_4 = arith.constant 0 : index
    %c0_5 = arith.constant 0 : index
    %2 = vector.load %arg1[%c0_2, %c0_3, %c0_4, %c0_5] : memref<1x16x16x4xf32, #tpu.memory_space<vmem>>, vector<1x16x16x4xf32>
    %3 = vector.shape_cast %2 : vector<1x16x16x4xf32> to vector<16x16x4xf32>
    %c1 = arith.constant 1 : index
    %c1_6 = arith.constant 1 : index
    %c0_7 = arith.constant 0 : index
    %4 = vector.load %arg6[%c1, %c1_6, %c0_7] : memref<18x18x4xf32, #tpu.memory_space<vmem>>, vector<16x16x4xf32>
    tpu.vector_store %arg6[%c1, %c1_6, %c0_7], %3 {strides = array<i32>} : memref<18x18x4xf32, #tpu.memory_space<vmem>>, vector<16x16x4xf32>,
    %c0_8 = arith.constant 0 : index
    %c0_9 = arith.constant 0 : index
    %c0_10 = arith.constant 0 : index
    %5 = vector.load %arg6[%c0_8, %c0_9, %c0_10] : memref<18x18x4xf32, #tpu.memory_space<vmem>>, vector<16x16x4xf32>
    %c0_11 = arith.constant 0 : index
    %c1_12 = arith.constant 1 : index
    %c0_13 = arith.constant 0 : index
    %6 = vector.load %arg6[%c0_11, %c1_12, %c0_13] : memref<18x18x4xf32, #tpu.memory_space<vmem>>, vector<16x16x4xf32>
    %c0_14 = arith.constant 0 : index
    %c2 = arith.constant 2 : index
    %c0_15 = arith.constant 0 : index
    %7 = vector.load %arg6[%c0_14, %c2, %c0_15] : memref<18x18x4xf32, #tpu.memory_space<vmem>>, vector<16x16x4xf32>
    %c1_16 = arith.constant 1 : index
    %c0_17 = arith.constant 0 : index
    %c0_18 = arith.constant 0 : index
    %8 = vector.load %arg6[%c1_16, %c0_17, %c0_18] : memref<18x18x4xf32, #tpu.memory_space<vmem>>, vector<16x16x4xf32>
    %c1_19 = arith.constant 1 : index
    %c1_20 = arith.constant 1 : index
    %c0_21 = arith.constant 0 : index
    %9 = vector.load %arg6[%c1_19, %c1_20, %c0_21] : memref<18x18x4xf32, #tpu.memory_space<vmem>>, vector<16x16x4xf32>
    %c1_22 = arith.constant 1 : index
    %c2_23 = arith.constant 2 : index
    %c0_24 = arith.constant 0 : index
    %10 = vector.load %arg6[%c1_22, %c2_23, %c0_24] : memref<18x18x4xf32, #tpu.memory_space<vmem>>, vector<16x16x4xf32>
    %c2_25 = arith.constant 2 : index
    %c0_26 = arith.constant 0 : index
    %c0_27 = arith.constant 0 : index
    %11 = vector.load %arg6[%c2_25, %c0_26, %c0_27] : memref<18x18x4xf32, #tpu.memory_space<vmem>>, vector<16x16x4xf32>
    %c2_28 = arith.constant 2 : index
    %c1_29 = arith.constant 1 : index
    %c0_30 = arith.constant 0 : index
    %12 = vector.load %arg6[%c2_28, %c1_29, %c0_30] : memref<18x18x4xf32, #tpu.memory_space<vmem>>, vector<16x16x4xf32>
    %c2_31 = arith.constant 2 : index
    %c2_32 = arith.constant 2 : index
    %c0_33 = arith.constant 0 : index
    %13 = vector.load %arg6[%c2_31, %c2_32, %c0_33] : memref<18x18x4xf32, #tpu.memory_space<vmem>>, vector<16x16x4xf32>
    %14 = tpu.concatenate %5, %6, %7, %8, %9, %10, %11, %12, %13 in 2 : vector<16x16x4xf32>, vector<16x16x4xf32>, vector<16x16x4xf32>, vector<16x16x4xf32>, vector<16x16x4xf32>, vector<16x16x4xf32>, vector<16x16x4xf32>, vector<16x16x4xf32>, vector<16x16x4xf32> -> vector<16x16x36xf32>
    %15 = vector.shape_cast %14 : vector<16x16x36xf32> to vector<256x36xf32>
    %16 = arith.truncf %15 : vector<256x36xf32> to vector<256x36xbf16>
    %c0_34 = arith.constant 0 : index
    %c0_35 = arith.constant 0 : index
    %17 = vector.load %arg2[%c0_34, %c0_35] : memref<36x8xbf16, #tpu.memory_space<vmem>>, vector<36x8xbf16>
    %cst_36 = arith.constant dense<0.000000e+00> : vector<256x8xf32>
    %18 = tpu.matmul %16, %17, %cst_36 {dimension_numbers = #tpu.dot_dimension_numbers<[1], [0], [0], [1], [0, 0, 1, 1], [], []>} : vector<256x36xbf16>, vector<36x8xbf16>, vector<256x8xf32> -> vector<256x8xf32>
    %c0_37 = arith.constant 0 : index
    %c0_38 = arith.constant 0 : index
    %19 = vector.load %arg3[%c0_37, %c0_38] : memref<1x8xf32, #tpu.memory_space<vmem>>, vector<1x8xf32>
    %20 = vector.broadcast %19 : vector<1x8xf32> to vector<256x8xf32>
    %21 = arith.mulf %18, %20 : vector<256x8xf32>
    %c0_39 = arith.constant 0 : index
    %c0_40 = arith.constant 0 : index
    %22 = vector.load %arg4[%c0_39, %c0_40] : memref<1x8xf32, #tpu.memory_space<vmem>>, vector<1x8xf32>
    %23 = vector.broadcast %22 : vector<1x8xf32> to vector<256x8xf32>
    %24 = arith.addf %21, %23 : vector<256x8xf32>
    %cst_41 = arith.constant 1.000000e-01 : f32
    %25 = vector.broadcast %cst_41 : f32 to vector<256x8xf32>
    %26 = arith.mulf %25, %24 : vector<256x8xf32>
    %27 = arith.maximumf %24, %26 : vector<256x8xf32>
    %28 = vector.shape_cast %27 : vector<256x8xf32> to vector<8x2x16x8xf32>
    %29 = vector.extract_strided_slice %28 {offsets = [0, 0, 0, 0], sizes = [8, 1, 16, 8], strides = [1, 1, 1, 1]} : vector<8x2x16x8xf32> to vector<8x1x16x8xf32>
    %30 = vector.shape_cast %29 : vector<8x1x16x8xf32> to vector<8x16x8xf32>
    %31 = vector.extract_strided_slice %28 {offsets = [0, 1, 0, 0], sizes = [8, 1, 16, 8], strides = [1, 1, 1, 1]} : vector<8x2x16x8xf32> to vector<8x1x16x8xf32>
    %32 = vector.shape_cast %31 : vector<8x1x16x8xf32> to vector<8x16x8xf32>
    %33 = arith.maximumf %30, %32 : vector<8x16x8xf32>
    %34 = vector.shape_cast %33 : vector<8x16x8xf32> to vector<8x8x2x8xf32>
    %35 = vector.extract_strided_slice %34 {offsets = [0, 0, 0, 0], sizes = [8, 8, 1, 8], strides = [1, 1, 1, 1]} : vector<8x8x2x8xf32> to vector<8x8x1x8xf32>
    %36 = vector.shape_cast %35 : vector<8x8x1x8xf32> to vector<8x8x8xf32>
    %37 = vector.extract_strided_slice %34 {offsets = [0, 0, 1, 0], sizes = [8, 8, 1, 8], strides = [1, 1, 1, 1]} : vector<8x8x2x8xf32> to vector<8x8x1x8xf32>
    %38 = vector.shape_cast %37 : vector<8x8x1x8xf32> to vector<8x8x8xf32>
    %39 = arith.maximumf %36, %38 : vector<8x8x8xf32>
    %c0_42 = arith.constant 0 : index
    %c0_43 = arith.constant 0 : index
    %c0_44 = arith.constant 0 : index
    %c0_45 = arith.constant 0 : index
    %40 = vector.load %arg5[%c0_42, %c0_43, %c0_44, %c0_45] : memref<1x8x8x8xf32, #tpu.memory_space<vmem>>, vector<1x8x8x8xf32>
    %41 = vector.shape_cast %40 : vector<1x8x8x8xf32> to vector<8x8x8xf32>
    %42 = vector.shape_cast %39 : vector<8x8x8xf32> to vector<1x8x8x8xf32>
    tpu.vector_store %arg5[%c0_42, %c0_43, %c0_44, %c0_45], %42 {strides = array<i32>} : memref<1x8x8x8xf32, #tpu.memory_space<vmem>>, vector<1x8x8x8xf32>,
    return
  }
  func.func @transform_0(%arg0: i32) -> (i32, i32, i32, i32) {
    %c0_i32 = arith.constant 0 : i32
    %c0_i32_0 = arith.constant 0 : i32
    %c0_i32_1 = arith.constant 0 : i32
    %c0_i32_2 = arith.constant 0 : i32
    return %arg0, %c0_i32, %c0_i32_0, %c0_i32_1 : i32, i32, i32, i32
  }
  func.func @transform_1(%arg0: i32) -> (i32, i32) {
    %c0_i32 = arith.constant 0 : i32
    %c0_i32_0 = arith.constant 0 : i32
    %c0_i32_1 = arith.constant 0 : i32
    return %c0_i32, %c0_i32_0 : i32, i32
  }
  func.func @transform_2(%arg0: i32) -> (i32, i32) {
    %c0_i32 = arith.constant 0 : i32
    %c0_i32_0 = arith.constant 0 : i32
    %c0_i32_1 = arith.constant 0 : i32
    return %c0_i32, %c0_i32_0 : i32, i32
  }
  func.func @transform_3(%arg0: i32) -> (i32, i32) {
    %c0_i32 = arith.constant 0 : i32
    %c0_i32_0 = arith.constant 0 : i32
    %c0_i32_1 = arith.constant 0 : i32
    return %c0_i32, %c0_i32_0 : i32, i32
  }
  func.func @transform_4(%arg0: i32) -> (i32, i32, i32, i32) {
    %c0_i32 = arith.constant 0 : i32
    %c0_i32_0 = arith.constant 0 : i32
    %c0_i32_1 = arith.constant 0 : i32
    %c0_i32_2 = arith.constant 0 : i32
    return %arg0, %c0_i32, %c0_i32_0, %c0_i32_1 : i32, i32, i32, i32
  }
}

</mosaic_0001>

<llo_original>
// kernel: darknet_tiny_block.1
$region0: #{darknet_tiny_block.1}
  #allocation0 [shape = 'u32[]', space=smem, size = 0x4, offset = 0x4, fixed_abs, tag = 'smem constant byte address 0x4 - core index']
  #allocation1 [shape = 'u32[144,128]{1,0:T(1,128)}', space=vmem, size = 0x12000, scoped, tag = 'internal scratch']
  #allocation2 [shape = 'f32[18,18,4]{2,1,0:T(8,128)}', space=vmem, size = 0x36000, scoped, tag = 'scratch operand']
  %s0 = inlined_call_operand.vmem [shape: f32[2,16,16,4], index: 0, kind: input, shape index: {}]
  %s1 = inlined_call_operand.vmem [shape: bf16[36,8], index: 1, kind: input, shape index: {}]
  %s2 = inlined_call_operand.vmem [shape: f32[1,8], index: 2, kind: input, shape index: {}]
  %s3 = inlined_call_operand.vmem [shape: f32[1,8], index: 3, kind: input, shape index: {}]
  %s4 = inlined_call_operand.vmem [shape: f32[2,8,8,8], index: 4, kind: output, shape index: {}]
  %s5 = sld [smem:[#allocation0]]
  $region49: #{darknet_tiny_block.1} parent=0
    _
  %s7 = ssub.s32 1, %s5
  %s8 = scalar_select 0, %s7, %s5
  loop: start=0, step=1, limit=4
  $region2: #{darknet_tiny_block.1} parent=0 // loop_pre_header
    _
  $region3: #{darknet_tiny_block.1} parent=0 // loop_header
    %s10 = sphi 0, %s14
    %p11 = scmp.ge.s32.totalorder %s10, 4
    %s20 = sphi 0, %s22
    %s23 = sphi 0, %s20
    %s24 = sphi 0, %s23
    %s40 = sphi 0, %s24
    %s44 = sphi 0, %s44
    %s46 = sphi 0, %s44
    %s47 = sphi 0, %s46
    %s61 = sphi 0, %s47
    %s65 = sphi 0, %s65
    %s67 = sphi 0, %s65
    %s68 = sphi 0, %s67
    %s82 = sphi 0, %s68
    %s86 = sphi 0, %s86
    %s88 = sphi 0, %s86
    %s89 = sphi 0, %s88
    %s103 = sphi 0, %s89
    %s109 = sphi 0, %s111
    %s112 = sphi 0, %s109
    %s113 = sphi 0, %s112
    %s129 = sphi 0, %s113
  $region4: #{darknet_tiny_block.1} parent=0 // loop_header_branch
    %13 = sbr.rel (%p11) target = $region8
  $region5: #{darknet_tiny_block.1} parent=0 // loop_body
    %s15 = ssub.s32 %s10, 1
    %s16 = ssub.s32 %s10, 2
    %s17 = sadd.s32 %s10, 1
    %s18 = ssub.s32 %s10, %s17
    %p19 = scmp.eq.s32.totalorder %s18, 0
    %s21 = sadd.s32 %s20, 1
    %s22 = scalar_select %p19, %s20, %s21
    %p25 = pneg %p19
    %p26 = scmp.eq.s32.totalorder %s10, 1
    %p27 = por %p25, %p26
    %p28 = scmp.ne.s32.totalorder %s20, %s23
    %p29 = scmp.eq.s32.totalorder %s10, 0
    %p30 = por %p28, %p29
    %p31 = scmp.ne.s32.totalorder %s20, %s23
    %p32 = scmp.eq.s32.totalorder %s15, 1
    %p33 = por %p31, %p32
    %p34 = scmp.ne.s32.totalorder %s23, %s24
    %p35 = scmp.eq.s32.totalorder %s15, 0
    %p36 = por %p34, %p35
    %p37 = scmp.ne.s32.totalorder %s23, %s24
    %p38 = scmp.eq.s32.totalorder %s16, 1
    %p39 = por %p37, %p38
    %p41 = scmp.ne.s32.totalorder %s24, %s40
    %p42 = scmp.eq.s32.totalorder %s16, 0
    %p43 = por %p41, %p42
    %s45 = sadd.s32 %s44, 1
    %p48 = scmp.eq.s32.totalorder %s10, 1
    %p49 = scmp.ne.s32.totalorder %s44, %s46
    %p50 = scmp.eq.s32.totalorder %s10, 0
    %p51 = por %p49, %p50
    %p52 = scmp.ne.s32.totalorder %s44, %s46
    %p53 = scmp.eq.s32.totalorder %s15, 1
    %p54 = por %p52, %p53
    %p55 = scmp.ne.s32.totalorder %s46, %s47
    %p56 = scmp.eq.s32.totalorder %s15, 0
    %p57 = por %p55, %p56
    %p58 = scmp.ne.s32.totalorder %s46, %s47
    %p59 = scmp.eq.s32.totalorder %s16, 1
    %p60 = por %p58, %p59
    %p62 = scmp.ne.s32.totalorder %s47, %s61
    %p63 = scmp.eq.s32.totalorder %s16, 0
    %p64 = por %p62, %p63
    %s66 = sadd.s32 %s65, 1
    %p69 = scmp.eq.s32.totalorder %s10, 1
    %p70 = scmp.ne.s32.totalorder %s65, %s67
    %p71 = scmp.eq.s32.totalorder %s10, 0
    %p72 = por %p70, %p71
    %p73 = scmp.ne.s32.totalorder %s65, %s67
    %p74 = scmp.eq.s32.totalorder %s15, 1
    %p75 = por %p73, %p74
    %p76 = scmp.ne.s32.totalorder %s67, %s68
    %p77 = scmp.eq.s32.totalorder %s15, 0
    %p78 = por %p76, %p77
    %p79 = scmp.ne.s32.totalorder %s67, %s68
    %p80 = scmp.eq.s32.totalorder %s16, 1
    %p81 = por %p79, %p80
    %p83 = scmp.ne.s32.totalorder %s68, %s82
    %p84 = scmp.eq.s32.totalorder %s16, 0
    %p85 = por %p83, %p84
    %s87 = sadd.s32 %s86, 1
    %p90 = scmp.eq.s32.totalorder %s10, 1
    %p91 = scmp.ne.s32.totalorder %s86, %s88
    %p92 = scmp.eq.s32.totalorder %s10, 0
    %p93 = por %p91, %p92
    %p94 = scmp.ne.s32.totalorder %s86, %s88
    %p95 = scmp.eq.s32.totalorder %s15, 1
    %p96 = por %p94, %p95
    %p97 = scmp.ne.s32.totalorder %s88, %s89
    %p98 = scmp.eq.s32.totalorder %s15, 0
    %p99 = por %p97, %p98
    %p100 = scmp.ne.s32.totalorder %s88, %s89
    %p101 = scmp.eq.s32.totalorder %s16, 1
    %p102 = por %p100, %p101
    %p104 = scmp.ne.s32.totalorder %s89, %s103
    %p105 = scmp.eq.s32.totalorder %s16, 0
    %p106 = por %p104, %p105
    %s107 = ssub.s32 %s10, %s17
    %p108 = scmp.eq.s32.totalorder %s107, 0
    %s110 = sadd.s32 %s109, 1
    %s111 = scalar_select %p108, %s109, %s110
    %p114 = pneg %p108
    %p115 = scmp.eq.s32.totalorder %s10, 1
    %p116 = por %p114, %p115
    %p117 = scmp.ne.s32.totalorder %s109, %s112
    %p118 = scmp.eq.s32.totalorder %s10, 0
    %p119 = por %p117, %p118
    %p120 = scmp.ne.s32.totalorder %s109, %s112
    %p121 = scmp.eq.s32.totalorder %s15, 1
    %p122 = por %p120, %p121
    %p123 = scmp.ne.s32.totalorder %s112, %s113
    %p124 = scmp.eq.s32.totalorder %s15, 0
    %p125 = por %p123, %p124
    %p126 = scmp.ne.s32.totalorder %s112, %s113
    %p127 = scmp.eq.s32.totalorder %s16, 1
    %p128 = por %p126, %p127
    %p130 = scmp.ne.s32.totalorder %s113, %s129
    %p131 = scmp.eq.s32.totalorder %s16, 0
    %p132 = por %p130, %p131
    %p133 = scmp.le.s32.totalorder 1, %s10
    %p134 = scmp.lt.s32.totalorder %s10, 3
    %p135 = pnand %p133, %p134
    %p136 = pneg %p135
    // Predicated region
    $region9: #{darknet_tiny_block.1} parent=5 // pred_check
      _
    $region10: #{darknet_tiny_block.1} parent=5 // pred_check_branch
      %138 = sbr.rel (%p135) target = $region12
    $region11: #{darknet_tiny_block.1} parent=5 // pred_region
      %s139 = ssub.s32 %s10, 1
      // Predicated region
      $region13: #{darknet_tiny_block.1} parent=11 // pred_check
        %p140 = pneg %p57
      $region14: #{darknet_tiny_block.1} parent=11 // pred_check_branch
        %142 = sbr.rel (%p140) target = $region16
      $region15: #{darknet_tiny_block.1} parent=11 // pred_region
        _
      $region16: #{darknet_tiny_block.1} parent=11 // pred_fallthru
        _
      // Predicated region
      $region17: #{darknet_tiny_block.1} parent=11 // pred_check
        %p143 = pneg %p78
      $region18: #{darknet_tiny_block.1} parent=11 // pred_check_branch
        %145 = sbr.rel (%p143) target = $region20
      $region19: #{darknet_tiny_block.1} parent=11 // pred_region
        _
      $region20: #{darknet_tiny_block.1} parent=11 // pred_fallthru
        _
      // Predicated region
      $region21: #{darknet_tiny_block.1} parent=11 // pred_check
        %p146 = pneg %p99
      $region22: #{darknet_tiny_block.1} parent=11 // pred_check_branch
        %148 = sbr.rel (%p146) target = $region24
      $region23: #{darknet_tiny_block.1} parent=11 // pred_region
        _
      $region24: #{darknet_tiny_block.1} parent=11 // pred_fallthru
        _
    $region12: #{darknet_tiny_block.1} parent=5 // pred_fallthru
      _
    %p149 = scmp.lt.s32.totalorder %s10, 2
    // Predicated region
    $region25: #{darknet_tiny_block.1} parent=5 // pred_check
      %p150 = pneg %p149
    $region26: #{darknet_tiny_block.1} parent=5 // pred_check_branch
      %152 = sbr.rel (%p150) target = $region28
    $region27: #{darknet_tiny_block.1} parent=5 // pred_region
      // Predicated region
      $region29: #{darknet_tiny_block.1} parent=27 // pred_check
        %p153 = pneg %p30
      $region30: #{darknet_tiny_block.1} parent=27 // pred_check_branch
        %155 = sbr.rel (%p153) target = $region32
      $region31: #{darknet_tiny_block.1} parent=27 // pred_region
        %p156 = scmp.lt.s32.totalorder %s10, 1
        %s157 = scalar_select %p156, %s10, 1
        %s158 = smul.addr %s157, 32
        %s159 = smul.addr %s158, 8
        %s160 = scalar_lea.vmem %s0, %s159
      $region32: #{darknet_tiny_block.1} parent=27 // pred_fallthru
        _
    $region28: #{darknet_tiny_block.1} parent=5 // pred_fallthru
      _
    %p161 = scmp.le.s32.totalorder 1, %s10
    %p162 = scmp.lt.s32.totalorder %s10, 3
    %p163 = pnand %p161, %p162
    %p164 = pneg %p163
    // Predicated region
    $region33: #{darknet_tiny_block.1} parent=5 // pred_check
      _
    $region34: #{darknet_tiny_block.1} parent=5 // pred_check_branch
      %166 = sbr.rel (%p163) target = $region36
    $region35: #{darknet_tiny_block.1} parent=5 // pred_region
      %s167 = ssub.s32 %s10, 1
      %p168 = scmp.lt.s32.totalorder %s15, 1
      %s169 = scalar_select %p168, %s15, 1
      %s170 = smul.addr %s169, 32
      %s171 = smul.addr %s170, 8
      %s172 = scalar_lea.vmem %s0, %s171
      %p173 = pneg %p36
      %p174 = pneg %p33
      %p175 = pneg %p57
      %p176 = pneg %p54
      %p177 = pneg %p78
      %p178 = pneg %p75
      %p179 = pneg %p99
      %p180 = pneg %p96
      %p181 = pneg %p125
      %p182 = pneg %p122
      %p183 = scmp.lt.s32.totalorder %s15, 1
      %s184 = scalar_select %p183, %s15, 1
      %s185 = smul.addr %s184, 8
      %s186 = smul.addr %s185, 8
      %s187 = scalar_lea.vmem %s4, %s186
      %p188 = scmp.lt.s32.totalorder %s15, 1
      %s189 = scalar_select %p188, %s15, 1
      %s190 = smul.addr %s189, 32
      %s191 = smul.addr %s190, 8
      %s192 = scalar_lea.vmem %s0, %s191
      %p193 = scmp.lt.s32.totalorder %s15, 1
      %s194 = scalar_select %p193, %s15, 1
      %s195 = smul.addr %s194, 8
      %s196 = smul.addr %s195, 8
      %s197 = scalar_lea.vmem %s4, %s196
      %vm199 = vcmask 31744
      %200 = vst.msk [vmem:[#allocation2] sm:$0xff] %vm199, 0.0
      %201 = vst.msk [vmem:[#allocation2 + $0x8] sm:$0xff] %vm199, 0.0
      %vm202 = vcmask 25600
      %203 = vst.msk [vmem:[#allocation2 + $0x10] sm:$0x3] %vm202, 0.0
      %204 = vst.msk [vmem:[#allocation2 + $0x18] sm:$0xff] %vm199, 0.0
      %205 = vst.msk [vmem:[#allocation2 + $0x20] sm:$0xff] %vm199, 0.0
      %206 = vst.msk [vmem:[#allocation2 + $0x28] sm:$0x3] %vm202, 0.0
      %207 = vst.msk [vmem:[#allocation2 + $0x30] sm:$0xff] %vm199, 0.0
      %208 = vst.msk [vmem:[#allocation2 + $0x38] sm:$0xff] %vm199, 0.0
      %209 = vst.msk [vmem:[#allocation2 + $0x40] sm:$0x3] %vm202, 0.0
      %210 = vst.msk [vmem:[#allocation2 + $0x48] sm:$0xff] %vm199, 0.0
      %211 = vst.msk [vmem:[#allocation2 + $0x50] sm:$0xff] %vm199, 0.0
      %212 = vst.msk [vmem:[#allocation2 + $0x58] sm:$0x3] %vm202, 0.0
      %213 = vst.msk [vmem:[#allocation2 + $0x60] sm:$0xff] %vm199, 0.0
      %214 = vst.msk [vmem:[#allocation2 + $0x68] sm:$0xff] %vm199, 0.0
      %215 = vst.msk [vmem:[#allocation2 + $0x70] sm:$0x3] %vm202, 0.0
      %216 = vst.msk [vmem:[#allocation2 + $0x78] sm:$0xff] %vm199, 0.0
      %217 = vst.msk [vmem:[#allocation2 + $0x80] sm:$0xff] %vm199, 0.0
      %218 = vst.msk [vmem:[#allocation2 + $0x88] sm:$0x3] %vm202, 0.0
      %219 = vst.msk [vmem:[#allocation2 + $0x90] sm:$0xff] %vm199, 0.0
      %220 = vst.msk [vmem:[#allocation2 + $0x98] sm:$0xff] %vm199, 0.0
      %221 = vst.msk [vmem:[#allocation2 + $0xa0] sm:$0x3] %vm202, 0.0
      %222 = vst.msk [vmem:[#allocation2 + $0xa8] sm:$0xff] %vm199, 0.0
      %223 = vst.msk [vmem:[#allocation2 + $0xb0] sm:$0xff] %vm199, 0.0
      %224 = vst.msk [vmem:[#allocation2 + $0xb8] sm:$0x3] %vm202, 0.0
      %225 = vst.msk [vmem:[#allocation2 + $0xc0] sm:$0xff] %vm199, 0.0
      %226 = vst.msk [vmem:[#allocation2 + $0xc8] sm:$0xff] %vm199, 0.0
      %227 = vst.msk [vmem:[#allocation2 + $0xd0] sm:$0x3] %vm202, 0.0
      %228 = vst.msk [vmem:[#allocation2 + $0xd8] sm:$0xff] %vm199, 0.0
      %229 = vst.msk [vmem:[#allocation2 + $0xe0] sm:$0xff] %vm199, 0.0
      %230 = vst.msk [vmem:[#allocation2 + $0xe8] sm:$0x3] %vm202, 0.0
      %231 = vst.msk [vmem:[#allocation2 + $0xf0] sm:$0xff] %vm199, 0.0
      %232 = vst.msk [vmem:[#allocation2 + $0xf8] sm:$0xff] %vm199, 0.0
      %233 = vst.msk [vmem:[#allocation2 + $0x100] sm:$0x3] %vm202, 0.0
      %234 = vst.msk [vmem:[#allocation2 + $0x108] sm:$0xff] %vm199, 0.0
      %235 = vst.msk [vmem:[#allocation2 + $0x110] sm:$0xff] %vm199, 0.0
      %236 = vst.msk [vmem:[#allocation2 + $0x118] sm:$0x3] %vm202, 0.0
      %237 = vst.msk [vmem:[#allocation2 + $0x120] sm:$0xff] %vm199, 0.0
      %238 = vst.msk [vmem:[#allocation2 + $0x128] sm:$0xff] %vm199, 0.0
      %239 = vst.msk [vmem:[#allocation2 + $0x130] sm:$0x3] %vm202, 0.0
      %240 = vst.msk [vmem:[#allocation2 + $0x138] sm:$0xff] %vm199, 0.0
      %241 = vst.msk [vmem:[#allocation2 + $0x140] sm:$0xff] %vm199, 0.0
      %242 = vst.msk [vmem:[#allocation2 + $0x148] sm:$0x3] %vm202, 0.0
      %243 = vst.msk [vmem:[#allocation2 + $0x150] sm:$0xff] %vm199, 0.0
      %244 = vst.msk [vmem:[#allocation2 + $0x158] sm:$0xff] %vm199, 0.0
      %245 = vst.msk [vmem:[#allocation2 + $0x160] sm:$0x3] %vm202, 0.0
      %246 = vst.msk [vmem:[#allocation2 + $0x168] sm:$0xff] %vm199, 0.0
      %247 = vst.msk [vmem:[#allocation2 + $0x170] sm:$0xff] %vm199, 0.0
      %248 = vst.msk [vmem:[#allocation2 + $0x178] sm:$0x3] %vm202, 0.0
      %249 = vst.msk [vmem:[#allocation2 + $0x180] sm:$0xff] %vm199, 0.0
      %250 = vst.msk [vmem:[#allocation2 + $0x188] sm:$0xff] %vm199, 0.0
      %251 = vst.msk [vmem:[#allocation2 + $0x190] sm:$0x3] %vm202, 0.0
      %252 = vst.msk [vmem:[#allocation2 + $0x198] sm:$0xff] %vm199, 0.0
      %253 = vst.msk [vmem:[#allocation2 + $0x1a0] sm:$0xff] %vm199, 0.0
      %254 = vst.msk [vmem:[#allocation2 + $0x1a8] sm:$0x3] %vm202, 0.0
      %v255 = vld [vmem:[%s192] sm:$0xff]
      %v256 = vld [vmem:[%s192 + $0x8] sm:$0xff]
      %v257 = vld [vmem:[%s192 + $0x10] sm:$0xff]
      %v258 = vld [vmem:[%s192 + $0x18] sm:$0xff]
      %v259 = vld [vmem:[%s192 + $0x20] sm:$0xff]
      %v260 = vld [vmem:[%s192 + $0x28] sm:$0xff]
      %v261 = vld [vmem:[%s192 + $0x30] sm:$0xff]
      %v262 = vld [vmem:[%s192 + $0x38] sm:$0xff]
      %v263 = vld [vmem:[%s192 + $0x40] sm:$0xff]
      %v264 = vld [vmem:[%s192 + $0x48] sm:$0xff]
      %v265 = vld [vmem:[%s192 + $0x50] sm:$0xff]
      %v266 = vld [vmem:[%s192 + $0x58] sm:$0xff]
      %v267 = vld [vmem:[%s192 + $0x60] sm:$0xff]
      %v268 = vld [vmem:[%s192 + $0x68] sm:$0xff]
      %v269 = vld [vmem:[%s192 + $0x70] sm:$0xff]
      %v270 = vld [vmem:[%s192 + $0x78] sm:$0xff]
      %v271 = vld [vmem:[%s192 + $0x80] sm:$0xff]
      %v272 = vld [vmem:[%s192 + $0x88] sm:$0xff]
      %v273 = vld [vmem:[%s192 + $0x90] sm:$0xff]
      %v274 = vld [vmem:[%s192 + $0x98] sm:$0xff]
      %v275 = vld [vmem:[%s192 + $0xa0] sm:$0xff]
      %v276 = vld [vmem:[%s192 + $0xa8] sm:$0xff]
      %v277 = vld [vmem:[%s192 + $0xb0] sm:$0xff]
      %v278 = vld [vmem:[%s192 + $0xb8] sm:$0xff]
      %v279 = vld [vmem:[%s192 + $0xc0] sm:$0xff]
      %v280 = vld [vmem:[%s192 + $0xc8] sm:$0xff]
      %v281 = vld [vmem:[%s192 + $0xd0] sm:$0xff]
      %v282 = vld [vmem:[%s192 + $0xd8] sm:$0xff]
      %v283 = vld [vmem:[%s192 + $0xe0] sm:$0xff]
      %v284 = vld [vmem:[%s192 + $0xe8] sm:$0xff]
      %v285 = vld [vmem:[%s192 + $0xf0] sm:$0xff]
      %v286 = vld [vmem:[%s192 + $0xf8] sm:$0xff]
      %s287 = scalar_lea.vmem [#allocation2], 24
      %288 = vst.msk [vmem:[%s287 + $0x1] sm:$0xff] %vm199, %v255
      %289 = vst.msk [vmem:[%s287 + $0x9] sm:$0xff] %vm199, %v256
      %290 = vst.msk [vmem:[%s287 + $0x19] sm:$0xff] %vm199, %v257
      %291 = vst.msk [vmem:[%s287 + $0x21] sm:$0xff] %vm199, %v258
      %292 = vst.msk [vmem:[%s287 + $0x31] sm:$0xff] %vm199, %v259
      %293 = vst.msk [vmem:[%s287 + $0x39] sm:$0xff] %vm199, %v260
      %294 = vst.msk [vmem:[%s287 + $0x49] sm:$0xff] %vm199, %v261
      %295 = vst.msk [vmem:[%s287 + $0x51] sm:$0xff] %vm199, %v262
      %296 = vst.msk [vmem:[%s287 + $0x61] sm:$0xff] %vm199, %v263
      %297 = vst.msk [vmem:[%s287 + $0x69] sm:$0xff] %vm199, %v264
      %298 = vst.msk [vmem:[%s287 + $0x79] sm:$0xff] %vm199, %v265
      %299 = vst.msk [vmem:[%s287 + $0x81] sm:$0xff] %vm199, %v266
      %300 = vst.msk [vmem:[%s287 + $0x91] sm:$0xff] %vm199, %v267
      %301 = vst.msk [vmem:[%s287 + $0x99] sm:$0xff] %vm199, %v268
      %302 = vst.msk [vmem:[%s287 + $0xa9] sm:$0xff] %vm199, %v269
      %303 = vst.msk [vmem:[%s287 + $0xb1] sm:$0xff] %vm199, %v270
      %304 = vst.msk [vmem:[%s287 + $0xc1] sm:$0xff] %vm199, %v271
      %305 = vst.msk [vmem:[%s287 + $0xc9] sm:$0xff] %vm199, %v272
      %306 = vst.msk [vmem:[%s287 + $0xd9] sm:$0xff] %vm199, %v273
      %307 = vst.msk [vmem:[%s287 + $0xe1] sm:$0xff] %vm199, %v274
      %308 = vst.msk [vmem:[%s287 + $0xf1] sm:$0xff] %vm199, %v275
      %309 = vst.msk [vmem:[%s287 + $0xf9] sm:$0xff] %vm199, %v276
      %310 = vst.msk [vmem:[%s287 + $0x109] sm:$0xff] %vm199, %v277
      %311 = vst.msk [vmem:[%s287 + $0x111] sm:$0xff] %vm199, %v278
      %312 = vst.msk [vmem:[%s287 + $0x121] sm:$0xff] %vm199, %v279
      %313 = vst.msk [vmem:[%s287 + $0x129] sm:$0xff] %vm199, %v280
      %314 = vst.msk [vmem:[%s287 + $0x139] sm:$0xff] %vm199, %v281
      %315 = vst.msk [vmem:[%s287 + $0x141] sm:$0xff] %vm199, %v282
      %316 = vst.msk [vmem:[%s287 + $0x151] sm:$0xff] %vm199, %v283
      %317 = vst.msk [vmem:[%s287 + $0x159] sm:$0xff] %vm199, %v284
      %318 = vst.msk [vmem:[%s287 + $0x169] sm:$0xff] %vm199, %v285
      %319 = vst.msk [vmem:[%s287 + $0x171] sm:$0xff] %vm199, %v286
      %v320 = vld [vmem:[#allocation2] sm:$0xff]
      %v321 = vld [vmem:[#allocation2 + $0x8] sm:$0xff]
      %v322 = vld [vmem:[#allocation2 + $0x18] sm:$0xff]
      %v323 = vld [vmem:[#allocation2 + $0x20] sm:$0xff]
      %v324 = vld [vmem:[#allocation2 + $0x30] sm:$0xff]
      %v325 = vld [vmem:[#allocation2 + $0x38] sm:$0xff]
      %v326 = vld [vmem:[#allocation2 + $0x48] sm:$0xff]
      %v327 = vld [vmem:[#allocation2 + $0x50] sm:$0xff]
      %v328 = vld [vmem:[#allocation2 + $0x60] sm:$0xff]
      %v329 = vld [vmem:[#allocation2 + $0x68] sm:$0xff]
      %v330 = vld [vmem:[#allocation2 + $0x78] sm:$0xff]
      %v331 = vld [vmem:[#allocation2 + $0x80] sm:$0xff]
      %v332 = vld [vmem:[#allocation2 + $0x90] sm:$0xff]
      %v333 = vld [vmem:[#allocation2 + $0x98] sm:$0xff]
      %v334 = vld [vmem:[#allocation2 + $0xa8] sm:$0xff]
      %v335 = vld [vmem:[#allocation2 + $0xb0] sm:$0xff]
      %v336 = vld [vmem:[#allocation2 + $0xc0] sm:$0xff]
      %v337 = vld [vmem:[#allocation2 + $0xc8] sm:$0xff]
      %v338 = vld [vmem:[#allocation2 + $0xd8] sm:$0xff]
      %v339 = vld [vmem:[#allocation2 + $0xe0] sm:$0xff]
      %v340 = vld [vmem:[#allocation2 + $0xf0] sm:$0xff]
      %v341 = vld [vmem:[#allocation2 + $0xf8] sm:$0xff]
      %v342 = vld [vmem:[#allocation2 + $0x108] sm:$0xff]
      %v343 = vld [vmem:[#allocation2 + $0x110] sm:$0xff]
      %v344 = vld [vmem:[#allocation2 + $0x120] sm:$0xff]
      %v345 = vld [vmem:[#allocation2 + $0x128] sm:$0xff]
      %v346 = vld [vmem:[#allocation2 + $0x138] sm:$0xff]
      %v347 = vld [vmem:[#allocation2 + $0x140] sm:$0xff]
      %v348 = vld [vmem:[#allocation2 + $0x150] sm:$0xff]
      %v349 = vld [vmem:[#allocation2 + $0x158] sm:$0xff]
      %v350 = vld [vmem:[#allocation2 + $0x168] sm:$0xff]
      %v351 = vld [vmem:[#allocation2 + $0x170] sm:$0xff]
      %v352 = vld [vmem:[#allocation2 + $0x1] sm:$0xff]
      %v353 = vld [vmem:[#allocation2 + $0x9] sm:$0xff]
      %v354 = vld [vmem:[#allocation2 + $0x19] sm:$0xff]
      %v355 = vld [vmem:[#allocation2 + $0x21] sm:$0xff]
      %v356 = vld [vmem:[#allocation2 + $0x31] sm:$0xff]
      %v357 = vld [vmem:[#allocation2 + $0x39] sm:$0xff]
      %v358 = vld [vmem:[#allocation2 + $0x49] sm:$0xff]
      %v359 = vld [vmem:[#allocation2 + $0x51] sm:$0xff]
      %v360 = vld [vmem:[#allocation2 + $0x61] sm:$0xff]
      %v361 = vld [vmem:[#allocation2 + $0x69] sm:$0xff]
      %v362 = vld [vmem:[#allocation2 + $0x79] sm:$0xff]
      %v363 = vld [vmem:[#allocation2 + $0x81] sm:$0xff]
      %v364 = vld [vmem:[#allocation2 + $0x91] sm:$0xff]
      %v365 = vld [vmem:[#allocation2 + $0x99] sm:$0xff]
      %v366 = vld [vmem:[#allocation2 + $0xa9] sm:$0xff]
      %v367 = vld [vmem:[#allocation2 + $0xb1] sm:$0xff]
      %v368 = vld [vmem:[#allocation2 + $0xc1] sm:$0xff]
      %v369 = vld [vmem:[#allocation2 + $0xc9] sm:$0xff]
      %v370 = vld [vmem:[#allocation2 + $0xd9] sm:$0xff]
      %v371 = vld [vmem:[#allocation2 + $0xe1] sm:$0xff]
      %v372 = vld [vmem:[#allocation2 + $0xf1] sm:$0xff]
      %v373 = vld [vmem:[#allocation2 + $0xf9] sm:$0xff]
      %v374 = vld [vmem:[#allocation2 + $0x109] sm:$0xff]
      %v375 = vld [vmem:[#allocation2 + $0x111] sm:$0xff]
      %v376 = vld [vmem:[#allocation2 + $0x121] sm:$0xff]
      %v377 = vld [vmem:[#allocation2 + $0x129] sm:$0xff]
      %v378 = vld [vmem:[#allocation2 + $0x139] sm:$0xff]
      %v379 = vld [vmem:[#allocation2 + $0x141] sm:$0xff]
      %v380 = vld [vmem:[#allocation2 + $0x151] sm:$0xff]
      %v381 = vld [vmem:[#allocation2 + $0x159] sm:$0xff]
      %v382 = vld [vmem:[#allocation2 + $0x169] sm:$0xff]
      %v383 = vld [vmem:[#allocation2 + $0x171] sm:$0xff]
      %v384 = vld [vmem:[#allocation2 + $0x2] sm:$0xff]
      %v385 = vld [vmem:[#allocation2 + $0xa] sm:$0xff]
      %v386 = vld [vmem:[#allocation2 + $0x1a] sm:$0xff]
      %v387 = vld [vmem:[#allocation2 + $0x22] sm:$0xff]
      %v388 = vld [vmem:[#allocation2 + $0x32] sm:$0xff]
      %v389 = vld [vmem:[#allocation2 + $0x3a] sm:$0xff]
      %v390 = vld [vmem:[#allocation2 + $0x4a] sm:$0xff]
      %v391 = vld [vmem:[#allocation2 + $0x52] sm:$0xff]
      %v392 = vld [vmem:[#allocation2 + $0x62] sm:$0xff]
      %v393 = vld [vmem:[#allocation2 + $0x6a] sm:$0xff]
      %v394 = vld [vmem:[#allocation2 + $0x7a] sm:$0xff]
      %v395 = vld [vmem:[#allocation2 + $0x82] sm:$0xff]
      %v396 = vld [vmem:[#allocation2 + $0x92] sm:$0xff]
      %v397 = vld [vmem:[#allocation2 + $0x9a] sm:$0xff]
      %v398 = vld [vmem:[#allocation2 + $0xaa] sm:$0xff]
      %v399 = vld [vmem:[#allocation2 + $0xb2] sm:$0xff]
      %v400 = vld [vmem:[#allocation2 + $0xc2] sm:$0xff]
      %v401 = vld [vmem:[#allocation2 + $0xca] sm:$0xff]
      %v402 = vld [vmem:[#allocation2 + $0xda] sm:$0xff]
      %v403 = vld [vmem:[#allocation2 + $0xe2] sm:$0xff]
      %v404 = vld [vmem:[#allocation2 + $0xf2] sm:$0xff]
      %v405 = vld [vmem:[#allocation2 + $0xfa] sm:$0xff]
      %v406 = vld [vmem:[#allocation2 + $0x10a] sm:$0xff]
      %v407 = vld [vmem:[#allocation2 + $0x112] sm:$0xff]
      %v408 = vld [vmem:[#allocation2 + $0x122] sm:$0xff]
      %v409 = vld [vmem:[#allocation2 + $0x12a] sm:$0xff]
      %v410 = vld [vmem:[#allocation2 + $0x13a] sm:$0xff]
      %v411 = vld [vmem:[#allocation2 + $0x142] sm:$0xff]
      %v412 = vld [vmem:[#allocation2 + $0x152] sm:$0xff]
      %v413 = vld [vmem:[#allocation2 + $0x15a] sm:$0xff]
      %v414 = vld [vmem:[#allocation2 + $0x16a] sm:$0xff]
      %v415 = vld [vmem:[#allocation2 + $0x172] sm:$0xff]
      %v416 = vld [vmem:[%s287] sm:$0xff]
      %v417 = vld [vmem:[%s287 + $0x8] sm:$0xff]
      %v418 = vld [vmem:[%s287 + $0x18] sm:$0xff]
      %v419 = vld [vmem:[%s287 + $0x20] sm:$0xff]
      %v420 = vld [vmem:[%s287 + $0x30] sm:$0xff]
      %v421 = vld [vmem:[%s287 + $0x38] sm:$0xff]
      %v422 = vld [vmem:[%s287 + $0x48] sm:$0xff]
      %v423 = vld [vmem:[%s287 + $0x50] sm:$0xff]
      %v424 = vld [vmem:[%s287 + $0x60] sm:$0xff]
      %v425 = vld [vmem:[%s287 + $0x68] sm:$0xff]
      %v426 = vld [vmem:[%s287 + $0x78] sm:$0xff]
      %v427 = vld [vmem:[%s287 + $0x80] sm:$0xff]
      %v428 = vld [vmem:[%s287 + $0x90] sm:$0xff]
      %v429 = vld [vmem:[%s287 + $0x98] sm:$0xff]
      %v430 = vld [vmem:[%s287 + $0xa8] sm:$0xff]
      %v431 = vld [vmem:[%s287 + $0xb0] sm:$0xff]
      %v432 = vld [vmem:[%s287 + $0xc0] sm:$0xff]
      %v433 = vld [vmem:[%s287 + $0xc8] sm:$0xff]
      %v434 = vld [vmem:[%s287 + $0xd8] sm:$0xff]
      %v435 = vld [vmem:[%s287 + $0xe0] sm:$0xff]
      %v436 = vld [vmem:[%s287 + $0xf0] sm:$0xff]
      %v437 = vld [vmem:[%s287 + $0xf8] sm:$0xff]
      %v438 = vld [vmem:[%s287 + $0x108] sm:$0xff]
      %v439 = vld [vmem:[%s287 + $0x110] sm:$0xff]
      %v440 = vld [vmem:[%s287 + $0x120] sm:$0xff]
      %v441 = vld [vmem:[%s287 + $0x128] sm:$0xff]
      %v442 = vld [vmem:[%s287 + $0x138] sm:$0xff]
      %v443 = vld [vmem:[%s287 + $0x140] sm:$0xff]
      %v444 = vld [vmem:[%s287 + $0x150] sm:$0xff]
      %v445 = vld [vmem:[%s287 + $0x158] sm:$0xff]
      %v446 = vld [vmem:[%s287 + $0x168] sm:$0xff]
      %v447 = vld [vmem:[%s287 + $0x170] sm:$0xff]
      %v448 = vld [vmem:[%s287 + $0x1] sm:$0xff]
      %v449 = vld [vmem:[%s287 + $0x9] sm:$0xff]
      %v450 = vld [vmem:[%s287 + $0x19] sm:$0xff]
      %v451 = vld [vmem:[%s287 + $0x21] sm:$0xff]
      %v452 = vld [vmem:[%s287 + $0x31] sm:$0xff]
      %v453 = vld [vmem:[%s287 + $0x39] sm:$0xff]
      %v454 = vld [vmem:[%s287 + $0x49] sm:$0xff]
      %v455 = vld [vmem:[%s287 + $0x51] sm:$0xff]
      %v456 = vld [vmem:[%s287 + $0x61] sm:$0xff]
      %v457 = vld [vmem:[%s287 + $0x69] sm:$0xff]
      %v458 = vld [vmem:[%s287 + $0x79] sm:$0xff]
      %v459 = vld [vmem:[%s287 + $0x81] sm:$0xff]
      %v460 = vld [vmem:[%s287 + $0x91] sm:$0xff]
      %v461 = vld [vmem:[%s287 + $0x99] sm:$0xff]
      %v462 = vld [vmem:[%s287 + $0xa9] sm:$0xff]
      %v463 = vld [vmem:[%s287 + $0xb1] sm:$0xff]
      %v464 = vld [vmem:[%s287 + $0xc1] sm:$0xff]
      %v465 = vld [vmem:[%s287 + $0xc9] sm:$0xff]
      %v466 = vld [vmem:[%s287 + $0xd9] sm:$0xff]
      %v467 = vld [vmem:[%s287 + $0xe1] sm:$0xff]
      %v468 = vld [vmem:[%s287 + $0xf1] sm:$0xff]
      %v469 = vld [vmem:[%s287 + $0xf9] sm:$0xff]
      %v470 = vld [vmem:[%s287 + $0x109] sm:$0xff]
      %v471 = vld [vmem:[%s287 + $0x111] sm:$0xff]
      %v472 = vld [vmem:[%s287 + $0x121] sm:$0xff]
      %v473 = vld [vmem:[%s287 + $0x129] sm:$0xff]
      %v474 = vld [vmem:[%s287 + $0x139] sm:$0xff]
      %v475 = vld [vmem:[%s287 + $0x141] sm:$0xff]
      %v476 = vld [vmem:[%s287 + $0x151] sm:$0xff]
      %v477 = vld [vmem:[%s287 + $0x159] sm:$0xff]
      %v478 = vld [vmem:[%s287 + $0x169] sm:$0xff]
      %v479 = vld [vmem:[%s287 + $0x171] sm:$0xff]
      %v480 = vld [vmem:[%s287 + $0x2] sm:$0xff]
      %v481 = vld [vmem:[%s287 + $0xa] sm:$0xff]
      %v482 = vld [vmem:[%s287 + $0x1a] sm:$0xff]
      %v483 = vld [vmem:[%s287 + $0x22] sm:$0xff]
      %v484 = vld [vmem:[%s287 + $0x32] sm:$0xff]
      %v485 = vld [vmem:[%s287 + $0x3a] sm:$0xff]
      %v486 = vld [vmem:[%s287 + $0x4a] sm:$0xff]
      %v487 = vld [vmem:[%s287 + $0x52] sm:$0xff]
      %v488 = vld [vmem:[%s287 + $0x62] sm:$0xff]
      %v489 = vld [vmem:[%s287 + $0x6a] sm:$0xff]
      %v490 = vld [vmem:[%s287 + $0x7a] sm:$0xff]
      %v491 = vld [vmem:[%s287 + $0x82] sm:$0xff]
      %v492 = vld [vmem:[%s287 + $0x92] sm:$0xff]
      %v493 = vld [vmem:[%s287 + $0x9a] sm:$0xff]
      %v494 = vld [vmem:[%s287 + $0xaa] sm:$0xff]
      %v495 = vld [vmem:[%s287 + $0xb2] sm:$0xff]
      %v496 = vld [vmem:[%s287 + $0xc2] sm:$0xff]
      %v497 = vld [vmem:[%s287 + $0xca] sm:$0xff]
      %v498 = vld [vmem:[%s287 + $0xda] sm:$0xff]
      %v499 = vld [vmem:[%s287 + $0xe2] sm:$0xff]
      %v500 = vld [vmem:[%s287 + $0xf2] sm:$0xff]
      %v501 = vld [vmem:[%s287 + $0xfa] sm:$0xff]
      %v502 = vld [vmem:[%s287 + $0x10a] sm:$0xff]
      %v503 = vld [vmem:[%s287 + $0x112] sm:$0xff]
      %v504 = vld [vmem:[%s287 + $0x122] sm:$0xff]
      %v505 = vld [vmem:[%s287 + $0x12a] sm:$0xff]
      %v506 = vld [vmem:[%s287 + $0x13a] sm:$0xff]
      %v507 = vld [vmem:[%s287 + $0x142] sm:$0xff]
      %v508 = vld [vmem:[%s287 + $0x152] sm:$0xff]
      %v509 = vld [vmem:[%s287 + $0x15a] sm:$0xff]
      %v510 = vld [vmem:[%s287 + $0x16a] sm:$0xff]
      %v511 = vld [vmem:[%s287 + $0x172] sm:$0xff]
      %s512 = scalar_lea.vmem [#allocation2], 48
      %v513 = vld [vmem:[%s512] sm:$0xff]
      %v514 = vld [vmem:[%s512 + $0x8] sm:$0xff]
      %v515 = vld [vmem:[%s512 + $0x18] sm:$0xff]
      %v516 = vld [vmem:[%s512 + $0x20] sm:$0xff]
      %v517 = vld [vmem:[%s512 + $0x30] sm:$0xff]
      %v518 = vld [vmem:[%s512 + $0x38] sm:$0xff]
      %v519 = vld [vmem:[%s512 + $0x48] sm:$0xff]
      %v520 = vld [vmem:[%s512 + $0x50] sm:$0xff]
      %v521 = vld [vmem:[%s512 + $0x60] sm:$0xff]
      %v522 = vld [vmem:[%s512 + $0x68] sm:$0xff]
      %v523 = vld [vmem:[%s512 + $0x78] sm:$0xff]
      %v524 = vld [vmem:[%s512 + $0x80] sm:$0xff]
      %v525 = vld [vmem:[%s512 + $0x90] sm:$0xff]
      %v526 = vld [vmem:[%s512 + $0x98] sm:$0xff]
      %v527 = vld [vmem:[%s512 + $0xa8] sm:$0xff]
      %v528 = vld [vmem:[%s512 + $0xb0] sm:$0xff]
      %v529 = vld [vmem:[%s512 + $0xc0] sm:$0xff]
      %v530 = vld [vmem:[%s512 + $0xc8] sm:$0xff]
      %v531 = vld [vmem:[%s512 + $0xd8] sm:$0xff]
      %v532 = vld [vmem:[%s512 + $0xe0] sm:$0xff]
      %v533 = vld [vmem:[%s512 + $0xf0] sm:$0xff]
      %v534 = vld [vmem:[%s512 + $0xf8] sm:$0xff]
      %v535 = vld [vmem:[%s512 + $0x108] sm:$0xff]
      %v536 = vld [vmem:[%s512 + $0x110] sm:$0xff]
      %v537 = vld [vmem:[%s512 + $0x120] sm:$0xff]
      %v538 = vld [vmem:[%s512 + $0x128] sm:$0xff]
      %v539 = vld [vmem:[%s512 + $0x138] sm:$0xff]
      %v540 = vld [vmem:[%s512 + $0x140] sm:$0xff]
      %v541 = vld [vmem:[%s512 + $0x150] sm:$0xff]
      %v542 = vld [vmem:[%s512 + $0x158] sm:$0xff]
      %v543 = vld [vmem:[%s512 + $0x168] sm:$0xff]
      %v544 = vld [vmem:[%s512 + $0x170] sm:$0xff]
      %v545 = vld [vmem:[%s512 + $0x1] sm:$0xff]
      %v546 = vld [vmem:[%s512 + $0x9] sm:$0xff]
      %v547 = vld [vmem:[%s512 + $0x19] sm:$0xff]
      %v548 = vld [vmem:[%s512 + $0x21] sm:$0xff]
      %v549 = vld [vmem:[%s512 + $0x31] sm:$0xff]
      %v550 = vld [vmem:[%s512 + $0x39] sm:$0xff]
      %v551 = vld [vmem:[%s512 + $0x49] sm:$0xff]
      %v552 = vld [vmem:[%s512 + $0x51] sm:$0xff]
      %v553 = vld [vmem:[%s512 + $0x61] sm:$0xff]
      %v554 = vld [vmem:[%s512 + $0x69] sm:$0xff]
      %v555 = vld [vmem:[%s512 + $0x79] sm:$0xff]
      %v556 = vld [vmem:[%s512 + $0x81] sm:$0xff]
      %v557 = vld [vmem:[%s512 + $0x91] sm:$0xff]
      %v558 = vld [vmem:[%s512 + $0x99] sm:$0xff]
      %v559 = vld [vmem:[%s512 + $0xa9] sm:$0xff]
      %v560 = vld [vmem:[%s512 + $0xb1] sm:$0xff]
      %v561 = vld [vmem:[%s512 + $0xc1] sm:$0xff]
      %v562 = vld [vmem:[%s512 + $0xc9] sm:$0xff]
      %v563 = vld [vmem:[%s512 + $0xd9] sm:$0xff]
      %v564 = vld [vmem:[%s512 + $0xe1] sm:$0xff]
      %v565 = vld [vmem:[%s512 + $0xf1] sm:$0xff]
      %v566 = vld [vmem:[%s512 + $0xf9] sm:$0xff]
      %v567 = vld [vmem:[%s512 + $0x109] sm:$0xff]
      %v568 = vld [vmem:[%s512 + $0x111] sm:$0xff]
      %v569 = vld [vmem:[%s512 + $0x121] sm:$0xff]
      %v570 = vld [vmem:[%s512 + $0x129] sm:$0xff]
      %v571 = vld [vmem:[%s512 + $0x139] sm:$0xff]
      %v572 = vld [vmem:[%s512 + $0x141] sm:$0xff]
      %v573 = vld [vmem:[%s512 + $0x151] sm:$0xff]
      %v574 = vld [vmem:[%s512 + $0x159] sm:$0xff]
      %v575 = vld [vmem:[%s512 + $0x169] sm:$0xff]
      %v576 = vld [vmem:[%s512 + $0x171] sm:$0xff]
      %v577 = vld [vmem:[%s512 + $0x2] sm:$0xff]
      %v578 = vld [vmem:[%s512 + $0xa] sm:$0xff]
      %v579 = vld [vmem:[%s512 + $0x1a] sm:$0xff]
      %v580 = vld [vmem:[%s512 + $0x22] sm:$0xff]
      %v581 = vld [vmem:[%s512 + $0x32] sm:$0xff]
      %v582 = vld [vmem:[%s512 + $0x3a] sm:$0xff]
      %v583 = vld [vmem:[%s512 + $0x4a] sm:$0xff]
      %v584 = vld [vmem:[%s512 + $0x52] sm:$0xff]
      %v585 = vld [vmem:[%s512 + $0x62] sm:$0xff]
      %v586 = vld [vmem:[%s512 + $0x6a] sm:$0xff]
      %v587 = vld [vmem:[%s512 + $0x7a] sm:$0xff]
      %v588 = vld [vmem:[%s512 + $0x82] sm:$0xff]
      %v589 = vld [vmem:[%s512 + $0x92] sm:$0xff]
      %v590 = vld [vmem:[%s512 + $0x9a] sm:$0xff]
      %v591 = vld [vmem:[%s512 + $0xaa] sm:$0xff]
      %v592 = vld [vmem:[%s512 + $0xb2] sm:$0xff]
      %v593 = vld [vmem:[%s512 + $0xc2] sm:$0xff]
      %v594 = vld [vmem:[%s512 + $0xca] sm:$0xff]
      %v595 = vld [vmem:[%s512 + $0xda] sm:$0xff]
      %v596 = vld [vmem:[%s512 + $0xe2] sm:$0xff]
      %v597 = vld [vmem:[%s512 + $0xf2] sm:$0xff]
      %v598 = vld [vmem:[%s512 + $0xfa] sm:$0xff]
      %v599 = vld [vmem:[%s512 + $0x10a] sm:$0xff]
      %v600 = vld [vmem:[%s512 + $0x112] sm:$0xff]
      %v601 = vld [vmem:[%s512 + $0x122] sm:$0xff]
      %v602 = vld [vmem:[%s512 + $0x12a] sm:$0xff]
      %v603 = vld [vmem:[%s512 + $0x13a] sm:$0xff]
      %v604 = vld [vmem:[%s512 + $0x142] sm:$0xff]
      %v605 = vld [vmem:[%s512 + $0x152] sm:$0xff]
      %v606 = vld [vmem:[%s512 + $0x15a] sm:$0xff]
      %v607 = vld [vmem:[%s512 + $0x16a] sm:$0xff]
      %v608 = vld [vmem:[%s512 + $0x172] sm:$0xff]
      %641 = vrot.lane.b32.xlu0 %v352, 4
      %v642 = vpop.permute.xlu0 %641
      %643 = vrot.lane.b32.xlu0 %v353, 4
      %v644 = vpop.permute.xlu0 %643
      %645 = vrot.lane.b32.xlu0 %v354, 4
      %v646 = vpop.permute.xlu0 %645
      %647 = vrot.lane.b32.xlu0 %v355, 4
      %v648 = vpop.permute.xlu0 %647
      %649 = vrot.lane.b32.xlu0 %v356, 4
      %v650 = vpop.permute.xlu0 %649
      %651 = vrot.lane.b32.xlu0 %v357, 4
      %v652 = vpop.permute.xlu0 %651
      %653 = vrot.lane.b32.xlu0 %v358, 4
      %v654 = vpop.permute.xlu0 %653
      %655 = vrot.lane.b32.xlu0 %v359, 4
      %v656 = vpop.permute.xlu0 %655
      %657 = vrot.lane.b32.xlu0 %v360, 4
      %v658 = vpop.permute.xlu0 %657
      %659 = vrot.lane.b32.xlu0 %v361, 4
      %v660 = vpop.permute.xlu0 %659
      %661 = vrot.lane.b32.xlu0 %v362, 4
      %v662 = vpop.permute.xlu0 %661
      %663 = vrot.lane.b32.xlu0 %v363, 4
      %v664 = vpop.permute.xlu0 %663
      %665 = vrot.lane.b32.xlu0 %v364, 4
      %v666 = vpop.permute.xlu0 %665
      %667 = vrot.lane.b32.xlu0 %v365, 4
      %v668 = vpop.permute.xlu0 %667
      %669 = vrot.lane.b32.xlu0 %v366, 4
      %v670 = vpop.permute.xlu0 %669
      %671 = vrot.lane.b32.xlu0 %v367, 4
      %v672 = vpop.permute.xlu0 %671
      %673 = vrot.lane.b32.xlu0 %v368, 4
      %v674 = vpop.permute.xlu0 %673
      %675 = vrot.lane.b32.xlu0 %v369, 4
      %v676 = vpop.permute.xlu0 %675
      %677 = vrot.lane.b32.xlu0 %v370, 4
      %v678 = vpop.permute.xlu0 %677
      %679 = vrot.lane.b32.xlu0 %v371, 4
      %v680 = vpop.permute.xlu0 %679
      %681 = vrot.lane.b32.xlu0 %v372, 4
      %v682 = vpop.permute.xlu0 %681
      %683 = vrot.lane.b32.xlu0 %v373, 4
      %v684 = vpop.permute.xlu0 %683
      %685 = vrot.lane.b32.xlu0 %v374, 4
      %v686 = vpop.permute.xlu0 %685
      %687 = vrot.lane.b32.xlu0 %v375, 4
      %v688 = vpop.permute.xlu0 %687
      %689 = vrot.lane.b32.xlu0 %v376, 4
      %v690 = vpop.permute.xlu0 %689
      %691 = vrot.lane.b32.xlu0 %v377, 4
      %v692 = vpop.permute.xlu0 %691
      %693 = vrot.lane.b32.xlu0 %v378, 4
      %v694 = vpop.permute.xlu0 %693
      %695 = vrot.lane.b32.xlu0 %v379, 4
      %v696 = vpop.permute.xlu0 %695
      %697 = vrot.lane.b32.xlu0 %v380, 4
      %v698 = vpop.permute.xlu0 %697
      %699 = vrot.lane.b32.xlu0 %v381, 4
      %v700 = vpop.permute.xlu0 %699
      %701 = vrot.lane.b32.xlu0 %v382, 4
      %v702 = vpop.permute.xlu0 %701
      %703 = vrot.lane.b32.xlu0 %v383, 4
      %v704 = vpop.permute.xlu0 %703
      %769 = vrot.lane.b32.xlu0 %v384, 8
      %v770 = vpop.permute.xlu0 %769
      %771 = vrot.lane.b32.xlu0 %v385, 8
      %v772 = vpop.permute.xlu0 %771
      %773 = vrot.lane.b32.xlu0 %v386, 8
      %v774 = vpop.permute.xlu0 %773
      %775 = vrot.lane.b32.xlu0 %v387, 8
      %v776 = vpop.permute.xlu0 %775
      %777 = vrot.lane.b32.xlu0 %v388, 8
      %v778 = vpop.permute.xlu0 %777
      %779 = vrot.lane.b32.xlu0 %v389, 8
      %v780 = vpop.permute.xlu0 %779
      %781 = vrot.lane.b32.xlu0 %v390, 8
      %v782 = vpop.permute.xlu0 %781
      %783 = vrot.lane.b32.xlu0 %v391, 8
      %v784 = vpop.permute.xlu0 %783
      %785 = vrot.lane.b32.xlu0 %v392, 8
      %v786 = vpop.permute.xlu0 %785
      %787 = vrot.lane.b32.xlu0 %v393, 8
      %v788 = vpop.permute.xlu0 %787
      %789 = vrot.lane.b32.xlu0 %v394, 8
      %v790 = vpop.permute.xlu0 %789
      %791 = vrot.lane.b32.xlu0 %v395, 8
      %v792 = vpop.permute.xlu0 %791
      %793 = vrot.lane.b32.xlu0 %v396, 8
      %v794 = vpop.permute.xlu0 %793
      %795 = vrot.lane.b32.xlu0 %v397, 8
      %v796 = vpop.permute.xlu0 %795
      %797 = vrot.lane.b32.xlu0 %v398, 8
      %v798 = vpop.permute.xlu0 %797
      %799 = vrot.lane.b32.xlu0 %v399, 8
      %v800 = vpop.permute.xlu0 %799
      %801 = vrot.lane.b32.xlu0 %v400, 8
      %v802 = vpop.permute.xlu0 %801
      %803 = vrot.lane.b32.xlu0 %v401, 8
      %v804 = vpop.permute.xlu0 %803
      %805 = vrot.lane.b32.xlu0 %v402, 8
      %v806 = vpop.permute.xlu0 %805
      %807 = vrot.lane.b32.xlu0 %v403, 8
      %v808 = vpop.permute.xlu0 %807
      %809 = vrot.lane.b32.xlu0 %v404, 8
      %v810 = vpop.permute.xlu0 %809
      %811 = vrot.lane.b32.xlu0 %v405, 8
      %v812 = vpop.permute.xlu0 %811
      %813 = vrot.lane.b32.xlu0 %v406, 8
      %v814 = vpop.permute.xlu0 %813
      %815 = vrot.lane.b32.xlu0 %v407, 8
      %v816 = vpop.permute.xlu0 %815
      %817 = vrot.lane.b32.xlu0 %v408, 8
      %v818 = vpop.permute.xlu0 %817
      %819 = vrot.lane.b32.xlu0 %v409, 8
      %v820 = vpop.permute.xlu0 %819
      %821 = vrot.lane.b32.xlu0 %v410, 8
      %v822 = vpop.permute.xlu0 %821
      %823 = vrot.lane.b32.xlu0 %v411, 8
      %v824 = vpop.permute.xlu0 %823
      %825 = vrot.lane.b32.xlu0 %v412, 8
      %v826 = vpop.permute.xlu0 %825
      %827 = vrot.lane.b32.xlu0 %v413, 8
      %v828 = vpop.permute.xlu0 %827
      %829 = vrot.lane.b32.xlu0 %v414, 8
      %v830 = vpop.permute.xlu0 %829
      %831 = vrot.lane.b32.xlu0 %v415, 8
      %v832 = vpop.permute.xlu0 %831
      %897 = vrot.lane.b32.xlu0 %v416, 12
      %v898 = vpop.permute.xlu0 %897
      %899 = vrot.lane.b32.xlu0 %v417, 12
      %v900 = vpop.permute.xlu0 %899
      %901 = vrot.lane.b32.xlu0 %v418, 12
      %v902 = vpop.permute.xlu0 %901
      %903 = vrot.lane.b32.xlu0 %v419, 12
      %v904 = vpop.permute.xlu0 %903
      %905 = vrot.lane.b32.xlu0 %v420, 12
      %v906 = vpop.permute.xlu0 %905
      %907 = vrot.lane.b32.xlu0 %v421, 12
      %v908 = vpop.permute.xlu0 %907
      %909 = vrot.lane.b32.xlu0 %v422, 12
      %v910 = vpop.permute.xlu0 %909
      %911 = vrot.lane.b32.xlu0 %v423, 12
      %v912 = vpop.permute.xlu0 %911
      %913 = vrot.lane.b32.xlu0 %v424, 12
      %v914 = vpop.permute.xlu0 %913
      %915 = vrot.lane.b32.xlu0 %v425, 12
      %v916 = vpop.permute.xlu0 %915
      %917 = vrot.lane.b32.xlu0 %v426, 12
      %v918 = vpop.permute.xlu0 %917
      %919 = vrot.lane.b32.xlu0 %v427, 12
      %v920 = vpop.permute.xlu0 %919
      %921 = vrot.lane.b32.xlu0 %v428, 12
      %v922 = vpop.permute.xlu0 %921
      %923 = vrot.lane.b32.xlu0 %v429, 12
      %v924 = vpop.permute.xlu0 %923
      %925 = vrot.lane.b32.xlu0 %v430, 12
      %v926 = vpop.permute.xlu0 %925
      %927 = vrot.lane.b32.xlu0 %v431, 12
      %v928 = vpop.permute.xlu0 %927
      %929 = vrot.lane.b32.xlu0 %v432, 12
      %v930 = vpop.permute.xlu0 %929
      %931 = vrot.lane.b32.xlu0 %v433, 12
      %v932 = vpop.permute.xlu0 %931
      %933 = vrot.lane.b32.xlu0 %v434, 12
      %v934 = vpop.permute.xlu0 %933
      %935 = vrot.lane.b32.xlu0 %v435, 12
      %v936 = vpop.permute.xlu0 %935
      %937 = vrot.lane.b32.xlu0 %v436, 12
      %v938 = vpop.permute.xlu0 %937
      %939 = vrot.lane.b32.xlu0 %v437, 12
      %v940 = vpop.permute.xlu0 %939
      %941 = vrot.lane.b32.xlu0 %v438, 12
      %v942 = vpop.permute.xlu0 %941
      %943 = vrot.lane.b32.xlu0 %v439, 12
      %v944 = vpop.permute.xlu0 %943
      %945 = vrot.lane.b32.xlu0 %v440, 12
      %v946 = vpop.permute.xlu0 %945
      %947 = vrot.lane.b32.xlu0 %v441, 12
      %v948 = vpop.permute.xlu0 %947
      %949 = vrot.lane.b32.xlu0 %v442, 12
      %v950 = vpop.permute.xlu0 %949
      %951 = vrot.lane.b32.xlu0 %v443, 12
      %v952 = vpop.permute.xlu0 %951
      %953 = vrot.lane.b32.xlu0 %v444, 12
      %v954 = vpop.permute.xlu0 %953
      %955 = vrot.lane.b32.xlu0 %v445, 12
      %v956 = vpop.permute.xlu0 %955
      %957 = vrot.lane.b32.xlu0 %v446, 12
      %v958 = vpop.permute.xlu0 %957
      %959 = vrot.lane.b32.xlu0 %v447, 12
      %v960 = vpop.permute.xlu0 %959
      %1025 = vrot.lane.b32.xlu0 %v448, 16
      %v1026 = vpop.permute.xlu0 %1025
      %1027 = vrot.lane.b32.xlu0 %v449, 16
      %v1028 = vpop.permute.xlu0 %1027
      %1029 = vrot.lane.b32.xlu0 %v450, 16
      %v1030 = vpop.permute.xlu0 %1029
      %1031 = vrot.lane.b32.xlu0 %v451, 16
      %v1032 = vpop.permute.xlu0 %1031
      %1033 = vrot.lane.b32.xlu0 %v452, 16
      %v1034 = vpop.permute.xlu0 %1033
      %1035 = vrot.lane.b32.xlu0 %v453, 16
      %v1036 = vpop.permute.xlu0 %1035
      %1037 = vrot.lane.b32.xlu0 %v454, 16
      %v1038 = vpop.permute.xlu0 %1037
      %1039 = vrot.lane.b32.xlu0 %v455, 16
      %v1040 = vpop.permute.xlu0 %1039
      %1041 = vrot.lane.b32.xlu0 %v456, 16
      %v1042 = vpop.permute.xlu0 %1041
      %1043 = vrot.lane.b32.xlu0 %v457, 16
      %v1044 = vpop.permute.xlu0 %1043
      %1045 = vrot.lane.b32.xlu0 %v458, 16
      %v1046 = vpop.permute.xlu0 %1045
      %1047 = vrot.lane.b32.xlu0 %v459, 16
      %v1048 = vpop.permute.xlu0 %1047
      %1049 = vrot.lane.b32.xlu0 %v460, 16
      %v1050 = vpop.permute.xlu0 %1049
      %1051 = vrot.lane.b32.xlu0 %v461, 16
      %v1052 = vpop.permute.xlu0 %1051
      %1053 = vrot.lane.b32.xlu0 %v462, 16
      %v1054 = vpop.permute.xlu0 %1053
      %1055 = vrot.lane.b32.xlu0 %v463, 16
      %v1056 = vpop.permute.xlu0 %1055
      %1057 = vrot.lane.b32.xlu0 %v464, 16
      %v1058 = vpop.permute.xlu0 %1057
      %1059 = vrot.lane.b32.xlu0 %v465, 16
      %v1060 = vpop.permute.xlu0 %1059
      %1061 = vrot.lane.b32.xlu0 %v466, 16
      %v1062 = vpop.permute.xlu0 %1061
      %1063 = vrot.lane.b32.xlu0 %v467, 16
      %v1064 = vpop.permute.xlu0 %1063
      %1065 = vrot.lane.b32.xlu0 %v468, 16
      %v1066 = vpop.permute.xlu0 %1065
      %1067 = vrot.lane.b32.xlu0 %v469, 16
      %v1068 = vpop.permute.xlu0 %1067
      %1069 = vrot.lane.b32.xlu0 %v470, 16
      %v1070 = vpop.permute.xlu0 %1069
      %1071 = vrot.lane.b32.xlu0 %v471, 16
      %v1072 = vpop.permute.xlu0 %1071
      %1073 = vrot.lane.b32.xlu0 %v472, 16
      %v1074 = vpop.permute.xlu0 %1073
      %1075 = vrot.lane.b32.xlu0 %v473, 16
      %v1076 = vpop.permute.xlu0 %1075
      %1077 = vrot.lane.b32.xlu0 %v474, 16
      %v1078 = vpop.permute.xlu0 %1077
      %1079 = vrot.lane.b32.xlu0 %v475, 16
      %v1080 = vpop.permute.xlu0 %1079
      %1081 = vrot.lane.b32.xlu0 %v476, 16
      %v1082 = vpop.permute.xlu0 %1081
      %1083 = vrot.lane.b32.xlu0 %v477, 16
      %v1084 = vpop.permute.xlu0 %1083
      %1085 = vrot.lane.b32.xlu0 %v478, 16
      %v1086 = vpop.permute.xlu0 %1085
      %1087 = vrot.lane.b32.xlu0 %v479, 16
      %v1088 = vpop.permute.xlu0 %1087
      %1153 = vrot.lane.b32.xlu0 %v480, 20
      %v1154 = vpop.permute.xlu0 %1153
      %1155 = vrot.lane.b32.xlu0 %v481, 20
      %v1156 = vpop.permute.xlu0 %1155
      %1157 = vrot.lane.b32.xlu0 %v482, 20
      %v1158 = vpop.permute.xlu0 %1157
      %1159 = vrot.lane.b32.xlu0 %v483, 20
      %v1160 = vpop.permute.xlu0 %1159
      %1161 = vrot.lane.b32.xlu0 %v484, 20
      %v1162 = vpop.permute.xlu0 %1161
      %1163 = vrot.lane.b32.xlu0 %v485, 20
      %v1164 = vpop.permute.xlu0 %1163
      %1165 = vrot.lane.b32.xlu0 %v486, 20
      %v1166 = vpop.permute.xlu0 %1165
      %1167 = vrot.lane.b32.xlu0 %v487, 20
      %v1168 = vpop.permute.xlu0 %1167
      %1169 = vrot.lane.b32.xlu0 %v488, 20
      %v1170 = vpop.permute.xlu0 %1169
      %1171 = vrot.lane.b32.xlu0 %v489, 20
      %v1172 = vpop.permute.xlu0 %1171
      %1173 = vrot.lane.b32.xlu0 %v490, 20
      %v1174 = vpop.permute.xlu0 %1173
      %1175 = vrot.lane.b32.xlu0 %v491, 20
      %v1176 = vpop.permute.xlu0 %1175
      %1177 = vrot.lane.b32.xlu0 %v492, 20
      %v1178 = vpop.permute.xlu0 %1177
      %1179 = vrot.lane.b32.xlu0 %v493, 20
      %v1180 = vpop.permute.xlu0 %1179
      %1181 = vrot.lane.b32.xlu0 %v494, 20
      %v1182 = vpop.permute.xlu0 %1181
      %1183 = vrot.lane.b32.xlu0 %v495, 20
      %v1184 = vpop.permute.xlu0 %1183
      %1185 = vrot.lane.b32.xlu0 %v496, 20
      %v1186 = vpop.permute.xlu0 %1185
      %1187 = vrot.lane.b32.xlu0 %v497, 20
      %v1188 = vpop.permute.xlu0 %1187
      %1189 = vrot.lane.b32.xlu0 %v498, 20
      %v1190 = vpop.permute.xlu0 %1189
      %1191 = vrot.lane.b32.xlu0 %v499, 20
      %v1192 = vpop.permute.xlu0 %1191
      %1193 = vrot.lane.b32.xlu0 %v500, 20
      %v1194 = vpop.permute.xlu0 %1193
      %1195 = vrot.lane.b32.xlu0 %v501, 20
      %v1196 = vpop.permute.xlu0 %1195
      %1197 = vrot.lane.b32.xlu0 %v502, 20
      %v1198 = vpop.permute.xlu0 %1197
      %1199 = vrot.lane.b32.xlu0 %v503, 20
      %v1200 = vpop.permute.xlu0 %1199
      %1201 = vrot.lane.b32.xlu0 %v504, 20
      %v1202 = vpop.permute.xlu0 %1201
      %1203 = vrot.lane.b32.xlu0 %v505, 20
      %v1204 = vpop.permute.xlu0 %1203
      %1205 = vrot.lane.b32.xlu0 %v506, 20
      %v1206 = vpop.permute.xlu0 %1205
      %1207 = vrot.lane.b32.xlu0 %v507, 20
      %v1208 = vpop.permute.xlu0 %1207
      %1209 = vrot.lane.b32.xlu0 %v508, 20
      %v1210 = vpop.permute.xlu0 %1209
      %1211 = vrot.lane.b32.xlu0 %v509, 20
      %v1212 = vpop.permute.xlu0 %1211
      %1213 = vrot.lane.b32.xlu0 %v510, 20
      %v1214 = vpop.permute.xlu0 %1213
      %1215 = vrot.lane.b32.xlu0 %v511, 20
      %v1216 = vpop.permute.xlu0 %1215
      %1281 = vrot.lane.b32.xlu0 %v513, 24
      %v1282 = vpop.permute.xlu0 %1281
      %1283 = vrot.lane.b32.xlu0 %v514, 24
      %v1284 = vpop.permute.xlu0 %1283
      %1285 = vrot.lane.b32.xlu0 %v515, 24
      %v1286 = vpop.permute.xlu0 %1285
      %1287 = vrot.lane.b32.xlu0 %v516, 24
      %v1288 = vpop.permute.xlu0 %1287
      %1289 = vrot.lane.b32.xlu0 %v517, 24
      %v1290 = vpop.permute.xlu0 %1289
      %1291 = vrot.lane.b32.xlu0 %v518, 24
      %v1292 = vpop.permute.xlu0 %1291
      %1293 = vrot.lane.b32.xlu0 %v519, 24
      %v1294 = vpop.permute.xlu0 %1293
      %1295 = vrot.lane.b32.xlu0 %v520, 24
      %v1296 = vpop.permute.xlu0 %1295
      %1297 = vrot.lane.b32.xlu0 %v521, 24
      %v1298 = vpop.permute.xlu0 %1297
      %1299 = vrot.lane.b32.xlu0 %v522, 24
      %v1300 = vpop.permute.xlu0 %1299
      %1301 = vrot.lane.b32.xlu0 %v523, 24
      %v1302 = vpop.permute.xlu0 %1301
      %1303 = vrot.lane.b32.xlu0 %v524, 24
      %v1304 = vpop.permute.xlu0 %1303
      %1305 = vrot.lane.b32.xlu0 %v525, 24
      %v1306 = vpop.permute.xlu0 %1305
      %1307 = vrot.lane.b32.xlu0 %v526, 24
      %v1308 = vpop.permute.xlu0 %1307
      %1309 = vrot.lane.b32.xlu0 %v527, 24
      %v1310 = vpop.permute.xlu0 %1309
      %1311 = vrot.lane.b32.xlu0 %v528, 24
      %v1312 = vpop.permute.xlu0 %1311
      %1313 = vrot.lane.b32.xlu0 %v529, 24
      %v1314 = vpop.permute.xlu0 %1313
      %1315 = vrot.lane.b32.xlu0 %v530, 24
      %v1316 = vpop.permute.xlu0 %1315
      %1317 = vrot.lane.b32.xlu0 %v531, 24
      %v1318 = vpop.permute.xlu0 %1317
      %1319 = vrot.lane.b32.xlu0 %v532, 24
      %v1320 = vpop.permute.xlu0 %1319
      %1321 = vrot.lane.b32.xlu0 %v533, 24
      %v1322 = vpop.permute.xlu0 %1321
      %1323 = vrot.lane.b32.xlu0 %v534, 24
      %v1324 = vpop.permute.xlu0 %1323
      %1325 = vrot.lane.b32.xlu0 %v535, 24
      %v1326 = vpop.permute.xlu0 %1325
      %1327 = vrot.lane.b32.xlu0 %v536, 24
      %v1328 = vpop.permute.xlu0 %1327
      %1329 = vrot.lane.b32.xlu0 %v537, 24
      %v1330 = vpop.permute.xlu0 %1329
      %1331 = vrot.lane.b32.xlu0 %v538, 24
      %v1332 = vpop.permute.xlu0 %1331
      %1333 = vrot.lane.b32.xlu0 %v539, 24
      %v1334 = vpop.permute.xlu0 %1333
      %1335 = vrot.lane.b32.xlu0 %v540, 24
      %v1336 = vpop.permute.xlu0 %1335
      %1337 = vrot.lane.b32.xlu0 %v541, 24
      %v1338 = vpop.permute.xlu0 %1337
      %1339 = vrot.lane.b32.xlu0 %v542, 24
      %v1340 = vpop.permute.xlu0 %1339
      %1341 = vrot.lane.b32.xlu0 %v543, 24
      %v1342 = vpop.permute.xlu0 %1341
      %1343 = vrot.lane.b32.xlu0 %v544, 24
      %v1344 = vpop.permute.xlu0 %1343
      %1409 = vrot.lane.b32.xlu0 %v545, 28
      %v1410 = vpop.permute.xlu0 %1409
      %1411 = vrot.lane.b32.xlu0 %v546, 28
      %v1412 = vpop.permute.xlu0 %1411
      %1413 = vrot.lane.b32.xlu0 %v547, 28
      %v1414 = vpop.permute.xlu0 %1413
      %1415 = vrot.lane.b32.xlu0 %v548, 28
      %v1416 = vpop.permute.xlu0 %1415
      %1417 = vrot.lane.b32.xlu0 %v549, 28
      %v1418 = vpop.permute.xlu0 %1417
      %1419 = vrot.lane.b32.xlu0 %v550, 28
      %v1420 = vpop.permute.xlu0 %1419
      %1421 = vrot.lane.b32.xlu0 %v551, 28
      %v1422 = vpop.permute.xlu0 %1421
      %1423 = vrot.lane.b32.xlu0 %v552, 28
      %v1424 = vpop.permute.xlu0 %1423
      %1425 = vrot.lane.b32.xlu0 %v553, 28
      %v1426 = vpop.permute.xlu0 %1425
      %1427 = vrot.lane.b32.xlu0 %v554, 28
      %v1428 = vpop.permute.xlu0 %1427
      %1429 = vrot.lane.b32.xlu0 %v555, 28
      %v1430 = vpop.permute.xlu0 %1429
      %1431 = vrot.lane.b32.xlu0 %v556, 28
      %v1432 = vpop.permute.xlu0 %1431
      %1433 = vrot.lane.b32.xlu0 %v557, 28
      %v1434 = vpop.permute.xlu0 %1433
      %1435 = vrot.lane.b32.xlu0 %v558, 28
      %v1436 = vpop.permute.xlu0 %1435
      %1437 = vrot.lane.b32.xlu0 %v559, 28
      %v1438 = vpop.permute.xlu0 %1437
      %1439 = vrot.lane.b32.xlu0 %v560, 28
      %v1440 = vpop.permute.xlu0 %1439
      %1441 = vrot.lane.b32.xlu0 %v561, 28
      %v1442 = vpop.permute.xlu0 %1441
      %1443 = vrot.lane.b32.xlu0 %v562, 28
      %v1444 = vpop.permute.xlu0 %1443
      %1445 = vrot.lane.b32.xlu0 %v563, 28
      %v1446 = vpop.permute.xlu0 %1445
      %1447 = vrot.lane.b32.xlu0 %v564, 28
      %v1448 = vpop.permute.xlu0 %1447
      %1449 = vrot.lane.b32.xlu0 %v565, 28
      %v1450 = vpop.permute.xlu0 %1449
      %1451 = vrot.lane.b32.xlu0 %v566, 28
      %v1452 = vpop.permute.xlu0 %1451
      %1453 = vrot.lane.b32.xlu0 %v567, 28
      %v1454 = vpop.permute.xlu0 %1453
      %1455 = vrot.lane.b32.xlu0 %v568, 28
      %v1456 = vpop.permute.xlu0 %1455
      %1457 = vrot.lane.b32.xlu0 %v569, 28
      %v1458 = vpop.permute.xlu0 %1457
      %1459 = vrot.lane.b32.xlu0 %v570, 28
      %v1460 = vpop.permute.xlu0 %1459
      %1461 = vrot.lane.b32.xlu0 %v571, 28
      %v1462 = vpop.permute.xlu0 %1461
      %1463 = vrot.lane.b32.xlu0 %v572, 28
      %v1464 = vpop.permute.xlu0 %1463
      %1465 = vrot.lane.b32.xlu0 %v573, 28
      %v1466 = vpop.permute.xlu0 %1465
      %1467 = vrot.lane.b32.xlu0 %v574, 28
      %v1468 = vpop.permute.xlu0 %1467
      %1469 = vrot.lane.b32.xlu0 %v575, 28
      %v1470 = vpop.permute.xlu0 %1469
      %1471 = vrot.lane.b32.xlu0 %v576, 28
      %v1472 = vpop.permute.xlu0 %1471
      %1537 = vrot.lane.b32.xlu0 %v577, 32
      %v1538 = vpop.permute.xlu0 %1537
      %1539 = vrot.lane.b32.xlu0 %v578, 32
      %v1540 = vpop.permute.xlu0 %1539
      %1541 = vrot.lane.b32.xlu0 %v579, 32
      %v1542 = vpop.permute.xlu0 %1541
      %1543 = vrot.lane.b32.xlu0 %v580, 32
      %v1544 = vpop.permute.xlu0 %1543
      %1545 = vrot.lane.b32.xlu0 %v581, 32
      %v1546 = vpop.permute.xlu0 %1545
      %1547 = vrot.lane.b32.xlu0 %v582, 32
      %v1548 = vpop.permute.xlu0 %1547
      %1549 = vrot.lane.b32.xlu0 %v583, 32
      %v1550 = vpop.permute.xlu0 %1549
      %1551 = vrot.lane.b32.xlu0 %v584, 32
      %v1552 = vpop.permute.xlu0 %1551
      %1553 = vrot.lane.b32.xlu0 %v585, 32
      %v1554 = vpop.permute.xlu0 %1553
      %1555 = vrot.lane.b32.xlu0 %v586, 32
      %v1556 = vpop.permute.xlu0 %1555
      %1557 = vrot.lane.b32.xlu0 %v587, 32
      %v1558 = vpop.permute.xlu0 %1557
      %1559 = vrot.lane.b32.xlu0 %v588, 32
      %v1560 = vpop.permute.xlu0 %1559
      %1561 = vrot.lane.b32.xlu0 %v589, 32
      %v1562 = vpop.permute.xlu0 %1561
      %1563 = vrot.lane.b32.xlu0 %v590, 32
      %v1564 = vpop.permute.xlu0 %1563
      %1565 = vrot.lane.b32.xlu0 %v591, 32
      %v1566 = vpop.permute.xlu0 %1565
      %1567 = vrot.lane.b32.xlu0 %v592, 32
      %v1568 = vpop.permute.xlu0 %1567
      %1569 = vrot.lane.b32.xlu0 %v593, 32
      %v1570 = vpop.permute.xlu0 %1569
      %1571 = vrot.lane.b32.xlu0 %v594, 32
      %v1572 = vpop.permute.xlu0 %1571
      %1573 = vrot.lane.b32.xlu0 %v595, 32
      %v1574 = vpop.permute.xlu0 %1573
      %1575 = vrot.lane.b32.xlu0 %v596, 32
      %v1576 = vpop.permute.xlu0 %1575
      %1577 = vrot.lane.b32.xlu0 %v597, 32
      %v1578 = vpop.permute.xlu0 %1577
      %1579 = vrot.lane.b32.xlu0 %v598, 32
      %v1580 = vpop.permute.xlu0 %1579
      %1581 = vrot.lane.b32.xlu0 %v599, 32
      %v1582 = vpop.permute.xlu0 %1581
      %1583 = vrot.lane.b32.xlu0 %v600, 32
      %v1584 = vpop.permute.xlu0 %1583
      %1585 = vrot.lane.b32.xlu0 %v601, 32
      %v1586 = vpop.permute.xlu0 %1585
      %1587 = vrot.lane.b32.xlu0 %v602, 32
      %v1588 = vpop.permute.xlu0 %1587
      %1589 = vrot.lane.b32.xlu0 %v603, 32
      %v1590 = vpop.permute.xlu0 %1589
      %1591 = vrot.lane.b32.xlu0 %v604, 32
      %v1592 = vpop.permute.xlu0 %1591
      %1593 = vrot.lane.b32.xlu0 %v605, 32
      %v1594 = vpop.permute.xlu0 %1593
      %1595 = vrot.lane.b32.xlu0 %v606, 32
      %v1596 = vpop.permute.xlu0 %1595
      %1597 = vrot.lane.b32.xlu0 %v607, 32
      %v1598 = vpop.permute.xlu0 %1597
      %1599 = vrot.lane.b32.xlu0 %v608, 32
      %v1600 = vpop.permute.xlu0 %1599
      %v1633 = vsel %vm199, %v320, %v642
      %v1634 = vsel %vm199, %v321, %v644
      %v1635 = vsel %vm199, %v322, %v646
      %v1636 = vsel %vm199, %v323, %v648
      %v1637 = vsel %vm199, %v324, %v650
      %v1638 = vsel %vm199, %v325, %v652
      %v1639 = vsel %vm199, %v326, %v654
      %v1640 = vsel %vm199, %v327, %v656
      %v1641 = vsel %vm199, %v328, %v658
      %v1642 = vsel %vm199, %v329, %v660
      %v1643 = vsel %vm199, %v330, %v662
      %v1644 = vsel %vm199, %v331, %v664
      %v1645 = vsel %vm199, %v332, %v666
      %v1646 = vsel %vm199, %v333, %v668
      %v1647 = vsel %vm199, %v334, %v670
      %v1648 = vsel %vm199, %v335, %v672
      %v1649 = vsel %vm199, %v336, %v674
      %v1650 = vsel %vm199, %v337, %v676
      %v1651 = vsel %vm199, %v338, %v678
      %v1652 = vsel %vm199, %v339, %v680
      %v1653 = vsel %vm199, %v340, %v682
      %v1654 = vsel %vm199, %v341, %v684
      %v1655 = vsel %vm199, %v342, %v686
      %v1656 = vsel %vm199, %v343, %v688
      %v1657 = vsel %vm199, %v344, %v690
      %v1658 = vsel %vm199, %v345, %v692
      %v1659 = vsel %vm199, %v346, %v694
      %v1660 = vsel %vm199, %v347, %v696
      %v1661 = vsel %vm199, %v348, %v698
      %v1662 = vsel %vm199, %v349, %v700
      %v1663 = vsel %vm199, %v350, %v702
      %v1664 = vsel %vm199, %v351, %v704
      %vm1665 = vcmask 64512
      %v1666 = vsel %vm1665, %v1633, %v770
      %v1667 = vsel %vm1665, %v1634, %v772
      %v1668 = vsel %vm1665, %v1635, %v774
      %v1669 = vsel %vm1665, %v1636, %v776
      %v1670 = vsel %vm1665, %v1637, %v778
      %v1671 = vsel %vm1665, %v1638, %v780
      %v1672 = vsel %vm1665, %v1639, %v782
      %v1673 = vsel %vm1665, %v1640, %v784
      %v1674 = vsel %vm1665, %v1641, %v786
      %v1675 = vsel %vm1665, %v1642, %v788
      %v1676 = vsel %vm1665, %v1643, %v790
      %v1677 = vsel %vm1665, %v1644, %v792
      %v1678 = vsel %vm1665, %v1645, %v794
      %v1679 = vsel %vm1665, %v1646, %v796
      %v1680 = vsel %vm1665, %v1647, %v798
      %v1681 = vsel %vm1665, %v1648, %v800
      %v1682 = vsel %vm1665, %v1649, %v802
      %v1683 = vsel %vm1665, %v1650, %v804
      %v1684 = vsel %vm1665, %v1651, %v806
      %v1685 = vsel %vm1665, %v1652, %v808
      %v1686 = vsel %vm1665, %v1653, %v810
      %v1687 = vsel %vm1665, %v1654, %v812
      %v1688 = vsel %vm1665, %v1655, %v814
      %v1689 = vsel %vm1665, %v1656, %v816
      %v1690 = vsel %vm1665, %v1657, %v818
      %v1691 = vsel %vm1665, %v1658, %v820
      %v1692 = vsel %vm1665, %v1659, %v822
      %v1693 = vsel %vm1665, %v1660, %v824
      %v1694 = vsel %vm1665, %v1661, %v826
      %v1695 = vsel %vm1665, %v1662, %v828
      %v1696 = vsel %vm1665, %v1663, %v830
      %v1697 = vsel %vm1665, %v1664, %v832
      %vm1698 = vcmask 97280
      %v1699 = vsel %vm1698, %v1666, %v898
      %v1700 = vsel %vm1698, %v1667, %v900
      %v1701 = vsel %vm1698, %v1668, %v902
      %v1702 = vsel %vm1698, %v1669, %v904
      %v1703 = vsel %vm1698, %v1670, %v906
      %v1704 = vsel %vm1698, %v1671, %v908
      %v1705 = vsel %vm1698, %v1672, %v910
      %v1706 = vsel %vm1698, %v1673, %v912
      %v1707 = vsel %vm1698, %v1674, %v914
      %v1708 = vsel %vm1698, %v1675, %v916
      %v1709 = vsel %vm1698, %v1676, %v918
      %v1710 = vsel %vm1698, %v1677, %v920
      %v1711 = vsel %vm1698, %v1678, %v922
      %v1712 = vsel %vm1698, %v1679, %v924
      %v1713 = vsel %vm1698, %v1680, %v926
      %v1714 = vsel %vm1698, %v1681, %v928
      %v1715 = vsel %vm1698, %v1682, %v930
      %v1716 = vsel %vm1698, %v1683, %v932
      %v1717 = vsel %vm1698, %v1684, %v934
      %v1718 = vsel %vm1698, %v1685, %v936
      %v1719 = vsel %vm1698, %v1686, %v938
      %v1720 = vsel %vm1698, %v1687, %v940
      %v1721 = vsel %vm1698, %v1688, %v942
      %v1722 = vsel %vm1698, %v1689, %v944
      %v1723 = vsel %vm1698, %v1690, %v946
      %v1724 = vsel %vm1698, %v1691, %v948
      %v1725 = vsel %vm1698, %v1692, %v950
      %v1726 = vsel %vm1698, %v1693, %v952
      %v1727 = vsel %vm1698, %v1694, %v954
      %v1728 = vsel %vm1698, %v1695, %v956
      %v1729 = vsel %vm1698, %v1696, %v958
      %v1730 = vsel %vm1698, %v1697, %v960
      %vm1731 = vcmask 130048
      %v1732 = vsel %vm1731, %v1699, %v1026
      %v1733 = vsel %vm1731, %v1700, %v1028
      %v1734 = vsel %vm1731, %v1701, %v1030
      %v1735 = vsel %vm1731, %v1702, %v1032
      %v1736 = vsel %vm1731, %v1703, %v1034
      %v1737 = vsel %vm1731, %v1704, %v1036
      %v1738 = vsel %vm1731, %v1705, %v1038
      %v1739 = vsel %vm1731, %v1706, %v1040
      %v1740 = vsel %vm1731, %v1707, %v1042
      %v1741 = vsel %vm1731, %v1708, %v1044
      %v1742 = vsel %vm1731, %v1709, %v1046
      %v1743 = vsel %vm1731, %v1710, %v1048
      %v1744 = vsel %vm1731, %v1711, %v1050
      %v1745 = vsel %vm1731, %v1712, %v1052
      %v1746 = vsel %vm1731, %v1713, %v1054
      %v1747 = vsel %vm1731, %v1714, %v1056
      %v1748 = vsel %vm1731, %v1715, %v1058
      %v1749 = vsel %vm1731, %v1716, %v1060
      %v1750 = vsel %vm1731, %v1717, %v1062
      %v1751 = vsel %vm1731, %v1718, %v1064
      %v1752 = vsel %vm1731, %v1719, %v1066
      %v1753 = vsel %vm1731, %v1720, %v1068
      %v1754 = vsel %vm1731, %v1721, %v1070
      %v1755 = vsel %vm1731, %v1722, %v1072
      %v1756 = vsel %vm1731, %v1723, %v1074
      %v1757 = vsel %vm1731, %v1724, %v1076
      %v1758 = vsel %vm1731, %v1725, %v1078
      %v1759 = vsel %vm1731, %v1726, %v1080
      %v1760 = vsel %vm1731, %v1727, %v1082
      %v1761 = vsel %vm1731, %v1728, %v1084
      %v1762 = vsel %vm1731, %v1729, %v1086
      %v1763 = vsel %vm1731, %v1730, %v1088
      %vm1764 = vcmask 162816
      %v1765 = vsel %vm1764, %v1732, %v1154
      %v1766 = vsel %vm1764, %v1733, %v1156
      %v1767 = vsel %vm1764, %v1734, %v1158
      %v1768 = vsel %vm1764, %v1735, %v1160
      %v1769 = vsel %vm1764, %v1736, %v1162
      %v1770 = vsel %vm1764, %v1737, %v1164
      %v1771 = vsel %vm1764, %v1738, %v1166
      %v1772 = vsel %vm1764, %v1739, %v1168
      %v1773 = vsel %vm1764, %v1740, %v1170
      %v1774 = vsel %vm1764, %v1741, %v1172
      %v1775 = vsel %vm1764, %v1742, %v1174
      %v1776 = vsel %vm1764, %v1743, %v1176
      %v1777 = vsel %vm1764, %v1744, %v1178
      %v1778 = vsel %vm1764, %v1745, %v1180
      %v1779 = vsel %vm1764, %v1746, %v1182
      %v1780 = vsel %vm1764, %v1747, %v1184
      %v1781 = vsel %vm1764, %v1748, %v1186
      %v1782 = vsel %vm1764, %v1749, %v1188
      %v1783 = vsel %vm1764, %v1750, %v1190
      %v1784 = vsel %vm1764, %v1751, %v1192
      %v1785 = vsel %vm1764, %v1752, %v1194
      %v1786 = vsel %vm1764, %v1753, %v1196
      %v1787 = vsel %vm1764, %v1754, %v1198
      %v1788 = vsel %vm1764, %v1755, %v1200
      %v1789 = vsel %vm1764, %v1756, %v1202
      %v1790 = vsel %vm1764, %v1757, %v1204
      %v1791 = vsel %vm1764, %v1758, %v1206
      %v1792 = vsel %vm1764, %v1759, %v1208
      %v1793 = vsel %vm1764, %v1760, %v1210
      %v1794 = vsel %vm1764, %v1761, %v1212
      %v1795 = vsel %vm1764, %v1762, %v1214
      %v1796 = vsel %vm1764, %v1763, %v1216
      %vm1797 = vcmask 195584
      %v1798 = vsel %vm1797, %v1765, %v1282
      %v1799 = vsel %vm1797, %v1766, %v1284
      %v1800 = vsel %vm1797, %v1767, %v1286
      %v1801 = vsel %vm1797, %v1768, %v1288
      %v1802 = vsel %vm1797, %v1769, %v1290
      %v1803 = vsel %vm1797, %v1770, %v1292
      %v1804 = vsel %vm1797, %v1771, %v1294
      %v1805 = vsel %vm1797, %v1772, %v1296
      %v1806 = vsel %vm1797, %v1773, %v1298
      %v1807 = vsel %vm1797, %v1774, %v1300
      %v1808 = vsel %vm1797, %v1775, %v1302
      %v1809 = vsel %vm1797, %v1776, %v1304
      %v1810 = vsel %vm1797, %v1777, %v1306
      %v1811 = vsel %vm1797, %v1778, %v1308
      %v1812 = vsel %vm1797, %v1779, %v1310
      %v1813 = vsel %vm1797, %v1780, %v1312
      %v1814 = vsel %vm1797, %v1781, %v1314
      %v1815 = vsel %vm1797, %v1782, %v1316
      %v1816 = vsel %vm1797, %v1783, %v1318
      %v1817 = vsel %vm1797, %v1784, %v1320
      %v1818 = vsel %vm1797, %v1785, %v1322
      %v1819 = vsel %vm1797, %v1786, %v1324
      %v1820 = vsel %vm1797, %v1787, %v1326
      %v1821 = vsel %vm1797, %v1788, %v1328
      %v1822 = vsel %vm1797, %v1789, %v1330
      %v1823 = vsel %vm1797, %v1790, %v1332
      %v1824 = vsel %vm1797, %v1791, %v1334
      %v1825 = vsel %vm1797, %v1792, %v1336
      %v1826 = vsel %vm1797, %v1793, %v1338
      %v1827 = vsel %vm1797, %v1794, %v1340
      %v1828 = vsel %vm1797, %v1795, %v1342
      %v1829 = vsel %vm1797, %v1796, %v1344
      %vm1830 = vcmask 228352
      %v1831 = vsel %vm1830, %v1798, %v1410
      %v1832 = vsel %vm1830, %v1799, %v1412
      %v1833 = vsel %vm1830, %v1800, %v1414
      %v1834 = vsel %vm1830, %v1801, %v1416
      %v1835 = vsel %vm1830, %v1802, %v1418
      %v1836 = vsel %vm1830, %v1803, %v1420
      %v1837 = vsel %vm1830, %v1804, %v1422
      %v1838 = vsel %vm1830, %v1805, %v1424
      %v1839 = vsel %vm1830, %v1806, %v1426
      %v1840 = vsel %vm1830, %v1807, %v1428
      %v1841 = vsel %vm1830, %v1808, %v1430
      %v1842 = vsel %vm1830, %v1809, %v1432
      %v1843 = vsel %vm1830, %v1810, %v1434
      %v1844 = vsel %vm1830, %v1811, %v1436
      %v1845 = vsel %vm1830, %v1812, %v1438
      %v1846 = vsel %vm1830, %v1813, %v1440
      %v1847 = vsel %vm1830, %v1814, %v1442
      %v1848 = vsel %vm1830, %v1815, %v1444
      %v1849 = vsel %vm1830, %v1816, %v1446
      %v1850 = vsel %vm1830, %v1817, %v1448
      %v1851 = vsel %vm1830, %v1818, %v1450
      %v1852 = vsel %vm1830, %v1819, %v1452
      %v1853 = vsel %vm1830, %v1820, %v1454
      %v1854 = vsel %vm1830, %v1821, %v1456
      %v1855 = vsel %vm1830, %v1822, %v1458
      %v1856 = vsel %vm1830, %v1823, %v1460
      %v1857 = vsel %vm1830, %v1824, %v1462
      %v1858 = vsel %vm1830, %v1825, %v1464
      %v1859 = vsel %vm1830, %v1826, %v1466
      %v1860 = vsel %vm1830, %v1827, %v1468
      %v1861 = vsel %vm1830, %v1828, %v1470
      %v1862 = vsel %vm1830, %v1829, %v1472
      %vm1863 = vcmask 261120
      %v1864 = vsel %vm1863, %v1831, %v1538
      %v1865 = vsel %vm1863, %v1832, %v1540
      %v1866 = vsel %vm1863, %v1833, %v1542
      %v1867 = vsel %vm1863, %v1834, %v1544
      %v1868 = vsel %vm1863, %v1835, %v1546
      %v1869 = vsel %vm1863, %v1836, %v1548
      %v1870 = vsel %vm1863, %v1837, %v1550
      %v1871 = vsel %vm1863, %v1838, %v1552
      %v1872 = vsel %vm1863, %v1839, %v1554
      %v1873 = vsel %vm1863, %v1840, %v1556
      %v1874 = vsel %vm1863, %v1841, %v1558
      %v1875 = vsel %vm1863, %v1842, %v1560
      %v1876 = vsel %vm1863, %v1843, %v1562
      %v1877 = vsel %vm1863, %v1844, %v1564
      %v1878 = vsel %vm1863, %v1845, %v1566
      %v1879 = vsel %vm1863, %v1846, %v1568
      %v1880 = vsel %vm1863, %v1847, %v1570
      %v1881 = vsel %vm1863, %v1848, %v1572
      %v1882 = vsel %vm1863, %v1849, %v1574
      %v1883 = vsel %vm1863, %v1850, %v1576
      %v1884 = vsel %vm1863, %v1851, %v1578
      %v1885 = vsel %vm1863, %v1852, %v1580
      %v1886 = vsel %vm1863, %v1853, %v1582
      %v1887 = vsel %vm1863, %v1854, %v1584
      %v1888 = vsel %vm1863, %v1855, %v1586
      %v1889 = vsel %vm1863, %v1856, %v1588
      %v1890 = vsel %vm1863, %v1857, %v1590
      %v1891 = vsel %vm1863, %v1858, %v1592
      %v1892 = vsel %vm1863, %v1859, %v1594
      %v1893 = vsel %vm1863, %v1860, %v1596
      %v1894 = vsel %vm1863, %v1861, %v1598
      %v1895 = vsel %vm1863, %v1862, %v1600
      %v1896 = vpack.c.bf16 %v1865, %v1864
      %v1897 = vpack.c.bf16 %v1867, %v1866
      %v1898 = vpack.c.bf16 %v1869, %v1868
      %v1899 = vpack.c.bf16 %v1871, %v1870
      %v1900 = vpack.c.bf16 %v1873, %v1872
      %v1901 = vpack.c.bf16 %v1875, %v1874
      %v1902 = vpack.c.bf16 %v1877, %v1876
      %v1903 = vpack.c.bf16 %v1879, %v1878
      %v1904 = vpack.c.bf16 %v1881, %v1880
      %v1905 = vpack.c.bf16 %v1883, %v1882
      %v1906 = vpack.c.bf16 %v1885, %v1884
      %v1907 = vpack.c.bf16 %v1887, %v1886
      %v1908 = vpack.c.bf16 %v1889, %v1888
      %v1909 = vpack.c.bf16 %v1891, %v1890
      %v1910 = vpack.c.bf16 %v1893, %v1892
      %v1911 = vpack.c.bf16 %v1895, %v1894
      %v1912 = vld [vmem:[%s1] sm:$0xf]
      %v1913 = vld [vmem:[%s1 + $0x4] sm:$0xf]
      %v1914 = vld [vmem:[%s1 + $0x8] sm:$0xf]
      %v1915 = vld [vmem:[%s1 + $0xc] sm:$0xf]
      %v1916 = vld [vmem:[%s1 + $0x10] sm:$0x3]
      %v1922 = vunpack.c.l.b16 %v1912
      %v1923 = vunpack.c.l.b16 %v1913
      %v1924 = vunpack.c.l.b16 %v1914
      %v1925 = vunpack.c.l.b16 %v1915
      %v1926 = vunpack.c.l.b16 %v1916
      %v1927 = vpack.c.b16 %v1923, %v1922
      %v1928 = vpack.c.b16 %v1925, %v1924
      %v1929 = vpack.c.b16 %v1926, %v1926
      %vm1932 = vcmask 293888
      %v1934 = vsel %vm1932, %v1896, 0
      %v1937 = vsel %vm1932, %v1897, 0
      %v1940 = vsel %vm1932, %v1898, 0
      %v1943 = vsel %vm1932, %v1899, 0
      %v1946 = vsel %vm1932, %v1900, 0
      %v1949 = vsel %vm1932, %v1901, 0
      %v1952 = vsel %vm1932, %v1902, 0
      %v1955 = vsel %vm1932, %v1903, 0
      %v1958 = vsel %vm1932, %v1904, 0
      %v1961 = vsel %vm1932, %v1905, 0
      %v1964 = vsel %vm1932, %v1906, 0
      %v1967 = vsel %vm1932, %v1907, 0
      %v1970 = vsel %vm1932, %v1908, 0
      %v1973 = vsel %vm1932, %v1909, 0
      %v1976 = vsel %vm1932, %v1910, 0
      %v1979 = vsel %vm1932, %v1911, 0
      %vm1981 = vcmask 1041408
      %v1983 = vsel %vm1981, %v1929, 0
      %1985 = vmatprep.subr.bf16.mxu0 0
      %1986 = vmatpush1.bf16.msra.mxu0 %v1927
      %1987 = vmatprep.subr.bf16.mxu0 0
      %1988 = vmatpush1.bf16.msra.mxu0 %v1928
      %1989 = vmatprep.subr.bf16.mxu0 0
      %1990 = vmatpush1.bf16.msra.mxu0 %v1983
      %1991 = vmatprep.subr.bf16.mxu0 0
      %1992 = vmatpush1.bf16.msra.mxu0 0
      %1993 = vmatprep.subr.bf16.mxu0 0
      %1994 = vmatpush1.bf16.msra.mxu0 0
      %1995 = vmatprep.subr.bf16.mxu0 0
      %1996 = vmatpush1.bf16.msra.mxu0 0
      %1997 = vmatprep.subr.bf16.mxu0 0
      %1998 = vmatpush1.bf16.msra.mxu0 0
      %1999 = vmatprep.subr.bf16.mxu0 0
      %2000 = vmatpush1.bf16.msra.mxu0 0
      %2001 = vmatprep.subr.bf16.mxu0 0
      %2002 = vmatpush1.bf16.msra.mxu0 0
      %2003 = vmatprep.subr.bf16.mxu0 0
      %2004 = vmatpush1.bf16.msra.mxu0 0
      %2005 = vmatprep.subr.bf16.mxu0 0
      %2006 = vmatpush1.bf16.msra.mxu0 0
      %2007 = vmatprep.subr.bf16.mxu0 0
      %2008 = vmatpush1.bf16.msra.mxu0 0
      %2009 = vmatprep.subr.bf16.mxu0 0
      %2010 = vmatpush1.bf16.msra.mxu0 0
      %2011 = vmatprep.subr.bf16.mxu0 0
      %2012 = vmatpush1.bf16.msra.mxu0 0
      %2013 = vmatprep.subr.bf16.mxu0 0
      %2014 = vmatpush1.bf16.msra.mxu0 0
      %2015 = vmatprep.subr.bf16.mxu0 0
      %2016 = vmatpush1.bf16.msra.mxu0 0
      %2017 = vmatprep.mubr.bf16.mxu0 0
      %2018 = vmatmul.mubr.bf16.gmra.mrb[0].mxu0 %v1934
      %v2019 = vpop.f32.mrb[0].mxu0
      %v2020 = vadd.f32 0.0, %v2019
      %v2021 = vpop.f32.mrb[0].mxu0
      %v2022 = vpop.f32.mrb[0].mxu0
      %v2023 = vadd.f32 0.0, %v2022
      %v2024 = vpop.f32.mrb[0].mxu0
      %2025 = vmatprep.mubr.bf16.mxu0 0
      %2026 = vmatmul.mubr.bf16.gmra.mrb[0].mxu0 %v1937
      %v2027 = vpop.f32.mrb[0].mxu0
      %v2028 = vadd.f32 0.0, %v2027
      %v2029 = vpop.f32.mrb[0].mxu0
      %v2030 = vpop.f32.mrb[0].mxu0
      %v2031 = vadd.f32 0.0, %v2030
      %v2032 = vpop.f32.mrb[0].mxu0
      %2033 = vmatprep.mubr.bf16.mxu0 0
      %2034 = vmatmul.mubr.bf16.gmra.mrb[0].mxu0 %v1940
      %v2035 = vpop.f32.mrb[0].mxu0
      %v2036 = vadd.f32 0.0, %v2035
      %v2037 = vpop.f32.mrb[0].mxu0
      %v2038 = vpop.f32.mrb[0].mxu0
      %v2039 = vadd.f32 0.0, %v2038
      %v2040 = vpop.f32.mrb[0].mxu0
      %2041 = vmatprep.mubr.bf16.mxu0 0
      %2042 = vmatmul.mubr.bf16.gmra.mrb[0].mxu0 %v1943
      %v2043 = vpop.f32.mrb[0].mxu0
      %v2044 = vadd.f32 0.0, %v2043
      %v2045 = vpop.f32.mrb[0].mxu0
      %v2046 = vpop.f32.mrb[0].mxu0
      %v2047 = vadd.f32 0.0, %v2046
      %v2048 = vpop.f32.mrb[0].mxu0
      %2049 = vmatprep.mubr.bf16.mxu0 0
      %2050 = vmatmul.mubr.bf16.gmra.mrb[0].mxu0 %v1946
      %v2051 = vpop.f32.mrb[0].mxu0
      %v2052 = vadd.f32 0.0, %v2051
      %v2053 = vpop.f32.mrb[0].mxu0
      %v2054 = vpop.f32.mrb[0].mxu0
      %v2055 = vadd.f32 0.0, %v2054
      %v2056 = vpop.f32.mrb[0].mxu0
      %2057 = vmatprep.mubr.bf16.mxu0 0
      %2058 = vmatmul.mubr.bf16.gmra.mrb[0].mxu0 %v1949
      %v2059 = vpop.f32.mrb[0].mxu0
      %v2060 = vadd.f32 0.0, %v2059
      %v2061 = vpop.f32.mrb[0].mxu0
      %v2062 = vpop.f32.mrb[0].mxu0
      %v2063 = vadd.f32 0.0, %v2062
      %v2064 = vpop.f32.mrb[0].mxu0
      %2065 = vmatprep.mubr.bf16.mxu0 0
      %2066 = vmatmul.mubr.bf16.gmra.mrb[0].mxu0 %v1952
      %v2067 = vpop.f32.mrb[0].mxu0
      %v2068 = vadd.f32 0.0, %v2067
      %v2069 = vpop.f32.mrb[0].mxu0
      %v2070 = vpop.f32.mrb[0].mxu0
      %v2071 = vadd.f32 0.0, %v2070
      %v2072 = vpop.f32.mrb[0].mxu0
      %2073 = vmatprep.mubr.bf16.mxu0 0
      %2074 = vmatmul.mubr.bf16.gmra.mrb[0].mxu0 %v1955
      %v2075 = vpop.f32.mrb[0].mxu0
      %v2076 = vadd.f32 0.0, %v2075
      %v2077 = vpop.f32.mrb[0].mxu0
      %v2078 = vpop.f32.mrb[0].mxu0
      %v2079 = vadd.f32 0.0, %v2078
      %v2080 = vpop.f32.mrb[0].mxu0
      %2081 = vmatprep.mubr.bf16.mxu0 0
      %2082 = vmatmul.mubr.bf16.gmra.mrb[0].mxu0 %v1958
      %v2083 = vpop.f32.mrb[0].mxu0
      %v2084 = vadd.f32 0.0, %v2083
      %v2085 = vpop.f32.mrb[0].mxu0
      %v2086 = vpop.f32.mrb[0].mxu0
      %v2087 = vadd.f32 0.0, %v2086
      %v2088 = vpop.f32.mrb[0].mxu0
      %2089 = vmatprep.mubr.bf16.mxu0 0
      %2090 = vmatmul.mubr.bf16.gmra.mrb[0].mxu0 %v1961
      %v2091 = vpop.f32.mrb[0].mxu0
      %v2092 = vadd.f32 0.0, %v2091
      %v2093 = vpop.f32.mrb[0].mxu0
      %v2094 = vpop.f32.mrb[0].mxu0
      %v2095 = vadd.f32 0.0, %v2094
      %v2096 = vpop.f32.mrb[0].mxu0
      %2097 = vmatprep.mubr.bf16.mxu0 0
      %2098 = vmatmul.mubr.bf16.gmra.mrb[0].mxu0 %v1964
      %v2099 = vpop.f32.mrb[0].mxu0
      %v2100 = vadd.f32 0.0, %v2099
      %v2101 = vpop.f32.mrb[0].mxu0
      %v2102 = vpop.f32.mrb[0].mxu0
      %v2103 = vadd.f32 0.0, %v2102
      %v2104 = vpop.f32.mrb[0].mxu0
      %2105 = vmatprep.mubr.bf16.mxu0 0
      %2106 = vmatmul.mubr.bf16.gmra.mrb[0].mxu0 %v1967
      %v2107 = vpop.f32.mrb[0].mxu0
      %v2108 = vadd.f32 0.0, %v2107
      %v2109 = vpop.f32.mrb[0].mxu0
      %v2110 = vpop.f32.mrb[0].mxu0
      %v2111 = vadd.f32 0.0, %v2110
      %v2112 = vpop.f32.mrb[0].mxu0
      %2113 = vmatprep.mubr.bf16.mxu0 0
      %2114 = vmatmul.mubr.bf16.gmra.mrb[0].mxu0 %v1970
      %v2115 = vpop.f32.mrb[0].mxu0
      %v2116 = vadd.f32 0.0, %v2115
      %v2117 = vpop.f32.mrb[0].mxu0
      %v2118 = vpop.f32.mrb[0].mxu0
      %v2119 = vadd.f32 0.0, %v2118
      %v2120 = vpop.f32.mrb[0].mxu0
      %2121 = vmatprep.mubr.bf16.mxu0 0
      %2122 = vmatmul.mubr.bf16.gmra.mrb[0].mxu0 %v1973
      %v2123 = vpop.f32.mrb[0].mxu0
      %v2124 = vadd.f32 0.0, %v2123
      %v2125 = vpop.f32.mrb[0].mxu0
      %v2126 = vpop.f32.mrb[0].mxu0
      %v2127 = vadd.f32 0.0, %v2126
      %v2128 = vpop.f32.mrb[0].mxu0
      %2129 = vmatprep.mubr.bf16.mxu0 0
      %2130 = vmatmul.mubr.bf16.gmra.mrb[0].mxu0 %v1976
      %v2131 = vpop.f32.mrb[0].mxu0
      %v2132 = vadd.f32 0.0, %v2131
      %v2133 = vpop.f32.mrb[0].mxu0
      %v2134 = vpop.f32.mrb[0].mxu0
      %v2135 = vadd.f32 0.0, %v2134
      %v2136 = vpop.f32.mrb[0].mxu0
      %2137 = vmatprep.mubr.bf16.mxu0 0
      %2138 = vmatmul.mubr.bf16.gmra.mrb[0].mxu0 %v1979
      %v2139 = vpop.f32.mrb[0].mxu0
      %v2140 = vadd.f32 0.0, %v2139
      %v2141 = vpop.f32.mrb[0].mxu0
      %v2142 = vpop.f32.mrb[0].mxu0
      %v2143 = vadd.f32 0.0, %v2142
      %v2144 = vpop.f32.mrb[0].mxu0
      %2145 = vdwg.mxu0
      %v2146 = vld [vmem:[%s2] sm:$0x1]
      %v2148 = vlaneseq
      %v2149 = vshrl.u32 %v2148, 7
      %v2150 = vsub.s32 0, %v2149
      %v2151 = vrot.slane %v2146, %v2150
      %v2153 = vmul.f32 %v2020, %v2151
      %v2154 = vmul.f32 %v2023, %v2151
      %v2155 = vmul.f32 %v2028, %v2151
      %v2156 = vmul.f32 %v2031, %v2151
      %v2157 = vmul.f32 %v2036, %v2151
      %v2158 = vmul.f32 %v2039, %v2151
      %v2159 = vmul.f32 %v2044, %v2151
      %v2160 = vmul.f32 %v2047, %v2151
      %v2161 = vmul.f32 %v2052, %v2151
      %v2162 = vmul.f32 %v2055, %v2151
      %v2163 = vmul.f32 %v2060, %v2151
      %v2164 = vmul.f32 %v2063, %v2151
      %v2165 = vmul.f32 %v2068, %v2151
      %v2166 = vmul.f32 %v2071, %v2151
      %v2167 = vmul.f32 %v2076, %v2151
      %v2168 = vmul.f32 %v2079, %v2151
      %v2169 = vmul.f32 %v2084, %v2151
      %v2170 = vmul.f32 %v2087, %v2151
      %v2171 = vmul.f32 %v2092, %v2151
      %v2172 = vmul.f32 %v2095, %v2151
      %v2173 = vmul.f32 %v2100, %v2151
      %v2174 = vmul.f32 %v2103, %v2151
      %v2175 = vmul.f32 %v2108, %v2151
      %v2176 = vmul.f32 %v2111, %v2151
      %v2177 = vmul.f32 %v2116, %v2151
      %v2178 = vmul.f32 %v2119, %v2151
      %v2179 = vmul.f32 %v2124, %v2151
      %v2180 = vmul.f32 %v2127, %v2151
      %v2181 = vmul.f32 %v2132, %v2151
      %v2182 = vmul.f32 %v2135, %v2151
      %v2183 = vmul.f32 %v2140, %v2151
      %v2184 = vmul.f32 %v2143, %v2151
      %v2185 = vld [vmem:[%s3] sm:$0x1]
      %v2187 = vlaneseq
      %v2188 = vshrl.u32 %v2187, 7
      %v2189 = vsub.s32 0, %v2188
      %v2190 = vrot.slane %v2185, %v2189
      %v2192 = vadd.f32 %v2153, %v2190
      %v2193 = vadd.f32 %v2154, %v2190
      %v2194 = vadd.f32 %v2155, %v2190
      %v2195 = vadd.f32 %v2156, %v2190
      %v2196 = vadd.f32 %v2157, %v2190
      %v2197 = vadd.f32 %v2158, %v2190
      %v2198 = vadd.f32 %v2159, %v2190
      %v2199 = vadd.f32 %v2160, %v2190
      %v2200 = vadd.f32 %v2161, %v2190
      %v2201 = vadd.f32 %v2162, %v2190
      %v2202 = vadd.f32 %v2163, %v2190
      %v2203 = vadd.f32 %v2164, %v2190
      %v2204 = vadd.f32 %v2165, %v2190
      %v2205 = vadd.f32 %v2166, %v2190
      %v2206 = vadd.f32 %v2167, %v2190
      %v2207 = vadd.f32 %v2168, %v2190
      %v2208 = vadd.f32 %v2169, %v2190
      %v2209 = vadd.f32 %v2170, %v2190
      %v2210 = vadd.f32 %v2171, %v2190
      %v2211 = vadd.f32 %v2172, %v2190
      %v2212 = vadd.f32 %v2173, %v2190
      %v2213 = vadd.f32 %v2174, %v2190
      %v2214 = vadd.f32 %v2175, %v2190
      %v2215 = vadd.f32 %v2176, %v2190
      %v2216 = vadd.f32 %v2177, %v2190
      %v2217 = vadd.f32 %v2178, %v2190
      %v2218 = vadd.f32 %v2179, %v2190
      %v2219 = vadd.f32 %v2180, %v2190
      %v2220 = vadd.f32 %v2181, %v2190
      %v2221 = vadd.f32 %v2182, %v2190
      %v2222 = vadd.f32 %v2183, %v2190
      %v2223 = vadd.f32 %v2184, %v2190
      %v2224 = vmul.f32 %v2192, 0.1
      %v2225 = vmul.f32 %v2193, 0.1
      %v2226 = vmul.f32 %v2194, 0.1
      %v2227 = vmul.f32 %v2195, 0.1
      %v2228 = vmul.f32 %v2196, 0.1
      %v2229 = vmul.f32 %v2197, 0.1
      %v2230 = vmul.f32 %v2198, 0.1
      %v2231 = vmul.f32 %v2199, 0.1
      %v2232 = vmul.f32 %v2200, 0.1
      %v2233 = vmul.f32 %v2201, 0.1
      %v2234 = vmul.f32 %v2202, 0.1
      %v2235 = vmul.f32 %v2203, 0.1
      %v2236 = vmul.f32 %v2204, 0.1
      %v2237 = vmul.f32 %v2205, 0.1
      %v2238 = vmul.f32 %v2206, 0.1
      %v2239 = vmul.f32 %v2207, 0.1
      %v2240 = vmul.f32 %v2208, 0.1
      %v2241 = vmul.f32 %v2209, 0.1
      %v2242 = vmul.f32 %v2210, 0.1
      %v2243 = vmul.f32 %v2211, 0.1
      %v2244 = vmul.f32 %v2212, 0.1
      %v2245 = vmul.f32 %v2213, 0.1
      %v2246 = vmul.f32 %v2214, 0.1
      %v2247 = vmul.f32 %v2215, 0.1
      %v2248 = vmul.f32 %v2216, 0.1
      %v2249 = vmul.f32 %v2217, 0.1
      %v2250 = vmul.f32 %v2218, 0.1
      %v2251 = vmul.f32 %v2219, 0.1
      %v2252 = vmul.f32 %v2220, 0.1
      %v2253 = vmul.f32 %v2221, 0.1
      %v2254 = vmul.f32 %v2222, 0.1
      %v2255 = vmul.f32 %v2223, 0.1
      %v2256 = vmax.f32 %v2192, %v2224
      %v2257 = vmax.f32 %v2193, %v2225
      %v2258 = vmax.f32 %v2194, %v2226
      %v2259 = vmax.f32 %v2195, %v2227
      %v2260 = vmax.f32 %v2196, %v2228
      %v2261 = vmax.f32 %v2197, %v2229
      %v2262 = vmax.f32 %v2198, %v2230
      %v2263 = vmax.f32 %v2199, %v2231
      %v2264 = vmax.f32 %v2200, %v2232
      %v2265 = vmax.f32 %v2201, %v2233
      %v2266 = vmax.f32 %v2202, %v2234
      %v2267 = vmax.f32 %v2203, %v2235
      %v2268 = vmax.f32 %v2204, %v2236
      %v2269 = vmax.f32 %v2205, %v2237
      %v2270 = vmax.f32 %v2206, %v2238
      %v2271 = vmax.f32 %v2207, %v2239
      %v2272 = vmax.f32 %v2208, %v2240
      %v2273 = vmax.f32 %v2209, %v2241
      %v2274 = vmax.f32 %v2210, %v2242
      %v2275 = vmax.f32 %v2211, %v2243
      %v2276 = vmax.f32 %v2212, %v2244
      %v2277 = vmax.f32 %v2213, %v2245
      %v2278 = vmax.f32 %v2214, %v2246
      %v2279 = vmax.f32 %v2215, %v2247
      %v2280 = vmax.f32 %v2216, %v2248
      %v2281 = vmax.f32 %v2217, %v2249
      %v2282 = vmax.f32 %v2218, %v2250
      %v2283 = vmax.f32 %v2219, %v2251
      %v2284 = vmax.f32 %v2220, %v2252
      %v2285 = vmax.f32 %v2221, %v2253
      %v2286 = vmax.f32 %v2222, %v2254
      %v2287 = vmax.f32 %v2223, %v2255
      %v2288 = vmax.f32 %v2256, %v2258
      %v2289 = vmax.f32 %v2257, %v2259
      %v2290 = vmax.f32 %v2260, %v2262
      %v2291 = vmax.f32 %v2261, %v2263
      %v2292 = vmax.f32 %v2264, %v2266
      %v2293 = vmax.f32 %v2265, %v2267
      %v2294 = vmax.f32 %v2268, %v2270
      %v2295 = vmax.f32 %v2269, %v2271
      %v2296 = vmax.f32 %v2272, %v2274
      %v2297 = vmax.f32 %v2273, %v2275
      %v2298 = vmax.f32 %v2276, %v2278
      %v2299 = vmax.f32 %v2277, %v2279
      %v2300 = vmax.f32 %v2280, %v2282
      %v2301 = vmax.f32 %v2281, %v2283
      %v2302 = vmax.f32 %v2284, %v2286
      %v2303 = vmax.f32 %v2285, %v2287
      %v2320 = vcombine.high %v2288, %v2288
      %v2322 = vunpack.c.l.s4 1983009808
      %v2323 = vunpack.c.0.s8 %v2322
      %v2324 = vlaneseq
      %v2325 = vshrl.u32 %v2324, 7
      %v2326 = vsub.s32 %v2323, %v2325
      %v2327 = vrot.slane %v2288, %v2326
      %v2329 = vunpack.c.l.s4 1983009808
      %v2330 = vunpack.c.0.s8 %v2329
      %v2331 = vlaneseq
      %v2332 = vshrl.u32 %v2331, 7
      %v2333 = vsub.s32 %v2330, %v2332
      %v2334 = vrot.slane %v2320, %v2333
      %v2335 = vcombine.high %v2327, %v2327
      %v2336 = vcombine.high %v2334, %v2334
      %v2337 = vcombine.high %v2289, %v2289
      %v2339 = vunpack.c.l.s4 1983009808
      %v2340 = vunpack.c.0.s8 %v2339
      %v2341 = vlaneseq
      %v2342 = vshrl.u32 %v2341, 7
      %v2343 = vsub.s32 %v2340, %v2342
      %v2344 = vrot.slane %v2289, %v2343
      %v2346 = vunpack.c.l.s4 1983009808
      %v2347 = vunpack.c.0.s8 %v2346
      %v2348 = vlaneseq
      %v2349 = vshrl.u32 %v2348, 7
      %v2350 = vsub.s32 %v2347, %v2349
      %v2351 = vrot.slane %v2337, %v2350
      %v2352 = vcombine.high %v2344, %v2344
      %v2353 = vcombine.high %v2351, %v2351
      %v2354 = vcombine.high %v2290, %v2290
      %v2356 = vunpack.c.l.s4 1983009808
      %v2357 = vunpack.c.0.s8 %v2356
      %v2358 = vlaneseq
      %v2359 = vshrl.u32 %v2358, 7
      %v2360 = vsub.s32 %v2357, %v2359
      %v2361 = vrot.slane %v2290, %v2360
      %v2363 = vunpack.c.l.s4 1983009808
      %v2364 = vunpack.c.0.s8 %v2363
      %v2365 = vlaneseq
      %v2366 = vshrl.u32 %v2365, 7
      %v2367 = vsub.s32 %v2364, %v2366
      %v2368 = vrot.slane %v2354, %v2367
      %v2369 = vcombine.high %v2361, %v2361
      %v2370 = vcombine.high %v2368, %v2368
      %v2371 = vcombine.high %v2291, %v2291
      %v2373 = vunpack.c.l.s4 1983009808
      %v2374 = vunpack.c.0.s8 %v2373
      %v2375 = vlaneseq
      %v2376 = vshrl.u32 %v2375, 7
      %v2377 = vsub.s32 %v2374, %v2376
      %v2378 = vrot.slane %v2291, %v2377
      %v2380 = vunpack.c.l.s4 1983009808
      %v2381 = vunpack.c.0.s8 %v2380
      %v2382 = vlaneseq
      %v2383 = vshrl.u32 %v2382, 7
      %v2384 = vsub.s32 %v2381, %v2383
      %v2385 = vrot.slane %v2371, %v2384
      %v2386 = vcombine.high %v2378, %v2378
      %v2387 = vcombine.high %v2385, %v2385
      %v2388 = vcombine.high %v2292, %v2292
      %v2390 = vunpack.c.l.s4 1983009808
      %v2391 = vunpack.c.0.s8 %v2390
      %v2392 = vlaneseq
      %v2393 = vshrl.u32 %v2392, 7
      %v2394 = vsub.s32 %v2391, %v2393
      %v2395 = vrot.slane %v2292, %v2394
      %v2397 = vunpack.c.l.s4 1983009808
      %v2398 = vunpack.c.0.s8 %v2397
      %v2399 = vlaneseq
      %v2400 = vshrl.u32 %v2399, 7
      %v2401 = vsub.s32 %v2398, %v2400
      %v2402 = vrot.slane %v2388, %v2401
      %v2403 = vcombine.high %v2395, %v2395
      %v2404 = vcombine.high %v2402, %v2402
      %v2405 = vcombine.high %v2293, %v2293
      %v2407 = vunpack.c.l.s4 1983009808
      %v2408 = vunpack.c.0.s8 %v2407
      %v2409 = vlaneseq
      %v2410 = vshrl.u32 %v2409, 7
      %v2411 = vsub.s32 %v2408, %v2410
      %v2412 = vrot.slane %v2293, %v2411
      %v2414 = vunpack.c.l.s4 1983009808
      %v2415 = vunpack.c.0.s8 %v2414
      %v2416 = vlaneseq
      %v2417 = vshrl.u32 %v2416, 7
      %v2418 = vsub.s32 %v2415, %v2417
      %v2419 = vrot.slane %v2405, %v2418
      %v2420 = vcombine.high %v2412, %v2412
      %v2421 = vcombine.high %v2419, %v2419
      %v2422 = vcombine.high %v2294, %v2294
      %v2424 = vunpack.c.l.s4 1983009808
      %v2425 = vunpack.c.0.s8 %v2424
      %v2426 = vlaneseq
      %v2427 = vshrl.u32 %v2426, 7
      %v2428 = vsub.s32 %v2425, %v2427
      %v2429 = vrot.slane %v2294, %v2428
      %v2431 = vunpack.c.l.s4 1983009808
      %v2432 = vunpack.c.0.s8 %v2431
      %v2433 = vlaneseq
      %v2434 = vshrl.u32 %v2433, 7
      %v2435 = vsub.s32 %v2432, %v2434
      %v2436 = vrot.slane %v2422, %v2435
      %v2437 = vcombine.high %v2429, %v2429
      %v2438 = vcombine.high %v2436, %v2436
      %v2439 = vcombine.high %v2295, %v2295
      %v2441 = vunpack.c.l.s4 1983009808
      %v2442 = vunpack.c.0.s8 %v2441
      %v2443 = vlaneseq
      %v2444 = vshrl.u32 %v2443, 7
      %v2445 = vsub.s32 %v2442, %v2444
      %v2446 = vrot.slane %v2295, %v2445
      %v2448 = vunpack.c.l.s4 1983009808
      %v2449 = vunpack.c.0.s8 %v2448
      %v2450 = vlaneseq
      %v2451 = vshrl.u32 %v2450, 7
      %v2452 = vsub.s32 %v2449, %v2451
      %v2453 = vrot.slane %v2439, %v2452
      %v2454 = vcombine.high %v2446, %v2446
      %v2455 = vcombine.high %v2453, %v2453
      %v2456 = vcombine.high %v2296, %v2296
      %v2458 = vunpack.c.l.s4 1983009808
      %v2459 = vunpack.c.0.s8 %v2458
      %v2460 = vlaneseq
      %v2461 = vshrl.u32 %v2460, 7
      %v2462 = vsub.s32 %v2459, %v2461
      %v2463 = vrot.slane %v2296, %v2462
      %v2465 = vunpack.c.l.s4 1983009808
      %v2466 = vunpack.c.0.s8 %v2465
      %v2467 = vlaneseq
      %v2468 = vshrl.u32 %v2467, 7
      %v2469 = vsub.s32 %v2466, %v2468
      %v2470 = vrot.slane %v2456, %v2469
      %v2471 = vcombine.high %v2463, %v2463
      %v2472 = vcombine.high %v2470, %v2470
      %v2473 = vcombine.high %v2297, %v2297
      %v2475 = vunpack.c.l.s4 1983009808
      %v2476 = vunpack.c.0.s8 %v2475
      %v2477 = vlaneseq
      %v2478 = vshrl.u32 %v2477, 7
      %v2479 = vsub.s32 %v2476, %v2478
      %v2480 = vrot.slane %v2297, %v2479
      %v2482 = vunpack.c.l.s4 1983009808
      %v2483 = vunpack.c.0.s8 %v2482
      %v2484 = vlaneseq
      %v2485 = vshrl.u32 %v2484, 7
      %v2486 = vsub.s32 %v2483, %v2485
      %v2487 = vrot.slane %v2473, %v2486
      %v2488 = vcombine.high %v2480, %v2480
      %v2489 = vcombine.high %v2487, %v2487
      %v2490 = vcombine.high %v2298, %v2298
      %v2492 = vunpack.c.l.s4 1983009808
      %v2493 = vunpack.c.0.s8 %v2492
      %v2494 = vlaneseq
      %v2495 = vshrl.u32 %v2494, 7
      %v2496 = vsub.s32 %v2493, %v2495
      %v2497 = vrot.slane %v2298, %v2496
      %v2499 = vunpack.c.l.s4 1983009808
      %v2500 = vunpack.c.0.s8 %v2499
      %v2501 = vlaneseq
      %v2502 = vshrl.u32 %v2501, 7
      %v2503 = vsub.s32 %v2500, %v2502
      %v2504 = vrot.slane %v2490, %v2503
      %v2505 = vcombine.high %v2497, %v2497
      %v2506 = vcombine.high %v2504, %v2504
      %v2507 = vcombine.high %v2299, %v2299
      %v2509 = vunpack.c.l.s4 1983009808
      %v2510 = vunpack.c.0.s8 %v2509
      %v2511 = vlaneseq
      %v2512 = vshrl.u32 %v2511, 7
      %v2513 = vsub.s32 %v2510, %v2512
      %v2514 = vrot.slane %v2299, %v2513
      %v2516 = vunpack.c.l.s4 1983009808
      %v2517 = vunpack.c.0.s8 %v2516
      %v2518 = vlaneseq
      %v2519 = vshrl.u32 %v2518, 7
      %v2520 = vsub.s32 %v2517, %v2519
      %v2521 = vrot.slane %v2507, %v2520
      %v2522 = vcombine.high %v2514, %v2514
      %v2523 = vcombine.high %v2521, %v2521
      %v2524 = vcombine.high %v2300, %v2300
      %v2526 = vunpack.c.l.s4 1983009808
      %v2527 = vunpack.c.0.s8 %v2526
      %v2528 = vlaneseq
      %v2529 = vshrl.u32 %v2528, 7
      %v2530 = vsub.s32 %v2527, %v2529
      %v2531 = vrot.slane %v2300, %v2530
      %v2533 = vunpack.c.l.s4 1983009808
      %v2534 = vunpack.c.0.s8 %v2533
      %v2535 = vlaneseq
      %v2536 = vshrl.u32 %v2535, 7
      %v2537 = vsub.s32 %v2534, %v2536
      %v2538 = vrot.slane %v2524, %v2537
      %v2539 = vcombine.high %v2531, %v2531
      %v2540 = vcombine.high %v2538, %v2538
      %v2541 = vcombine.high %v2301, %v2301
      %v2543 = vunpack.c.l.s4 1983009808
      %v2544 = vunpack.c.0.s8 %v2543
      %v2545 = vlaneseq
      %v2546 = vshrl.u32 %v2545, 7
      %v2547 = vsub.s32 %v2544, %v2546
      %v2548 = vrot.slane %v2301, %v2547
      %v2550 = vunpack.c.l.s4 1983009808
      %v2551 = vunpack.c.0.s8 %v2550
      %v2552 = vlaneseq
      %v2553 = vshrl.u32 %v2552, 7
      %v2554 = vsub.s32 %v2551, %v2553
      %v2555 = vrot.slane %v2541, %v2554
      %v2556 = vcombine.high %v2548, %v2548
      %v2557 = vcombine.high %v2555, %v2555
      %v2558 = vcombine.high %v2302, %v2302
      %v2560 = vunpack.c.l.s4 1983009808
      %v2561 = vunpack.c.0.s8 %v2560
      %v2562 = vlaneseq
      %v2563 = vshrl.u32 %v2562, 7
      %v2564 = vsub.s32 %v2561, %v2563
      %v2565 = vrot.slane %v2302, %v2564
      %v2567 = vunpack.c.l.s4 1983009808
      %v2568 = vunpack.c.0.s8 %v2567
      %v2569 = vlaneseq
      %v2570 = vshrl.u32 %v2569, 7
      %v2571 = vsub.s32 %v2568, %v2570
      %v2572 = vrot.slane %v2558, %v2571
      %v2573 = vcombine.high %v2565, %v2565
      %v2574 = vcombine.high %v2572, %v2572
      %v2575 = vcombine.high %v2303, %v2303
      %v2577 = vunpack.c.l.s4 1983009808
      %v2578 = vunpack.c.0.s8 %v2577
      %v2579 = vlaneseq
      %v2580 = vshrl.u32 %v2579, 7
      %v2581 = vsub.s32 %v2578, %v2580
      %v2582 = vrot.slane %v2303, %v2581
      %v2584 = vunpack.c.l.s4 1983009808
      %v2585 = vunpack.c.0.s8 %v2584
      %v2586 = vlaneseq
      %v2587 = vshrl.u32 %v2586, 7
      %v2588 = vsub.s32 %v2585, %v2587
      %v2589 = vrot.slane %v2575, %v2588
      %v2590 = vcombine.high %v2582, %v2582
      %v2591 = vcombine.high %v2589, %v2589
      %v2656 = vrot.slane %v2327, 7
      %v2657 = vrot.slane %v2656, 2
      %v2658 = vrot.slane %v2335, 7
      %v2659 = vrot.slane %v2658, 2
      %v2660 = vrot.slane %v2334, 7
      %v2661 = vrot.slane %v2660, 2
      %v2662 = vrot.slane %v2336, 7
      %v2663 = vrot.slane %v2662, 2
      %v2664 = vrot.slane %v2344, 7
      %v2665 = vrot.slane %v2664, 2
      %v2666 = vrot.slane %v2352, 7
      %v2667 = vrot.slane %v2666, 2
      %v2668 = vrot.slane %v2351, 7
      %v2669 = vrot.slane %v2668, 2
      %v2670 = vrot.slane %v2353, 7
      %v2671 = vrot.slane %v2670, 2
      %v2672 = vrot.slane %v2361, 7
      %v2673 = vrot.slane %v2672, 2
      %v2674 = vrot.slane %v2369, 7
      %v2675 = vrot.slane %v2674, 2
      %v2676 = vrot.slane %v2368, 7
      %v2677 = vrot.slane %v2676, 2
      %v2678 = vrot.slane %v2370, 7
      %v2679 = vrot.slane %v2678, 2
      %v2680 = vrot.slane %v2378, 7
      %v2681 = vrot.slane %v2680, 2
      %v2682 = vrot.slane %v2386, 7
      %v2683 = vrot.slane %v2682, 2
      %v2684 = vrot.slane %v2385, 7
      %v2685 = vrot.slane %v2684, 2
      %v2686 = vrot.slane %v2387, 7
      %v2687 = vrot.slane %v2686, 2
      %v2688 = vrot.slane %v2395, 7
      %v2689 = vrot.slane %v2688, 2
      %v2690 = vrot.slane %v2403, 7
      %v2691 = vrot.slane %v2690, 2
      %v2692 = vrot.slane %v2402, 7
      %v2693 = vrot.slane %v2692, 2
      %v2694 = vrot.slane %v2404, 7
      %v2695 = vrot.slane %v2694, 2
      %v2696 = vrot.slane %v2412, 7
      %v2697 = vrot.slane %v2696, 2
      %v2698 = vrot.slane %v2420, 7
      %v2699 = vrot.slane %v2698, 2
      %v2700 = vrot.slane %v2419, 7
      %v2701 = vrot.slane %v2700, 2
      %v2702 = vrot.slane %v2421, 7
      %v2703 = vrot.slane %v2702, 2
      %v2704 = vrot.slane %v2429, 7
      %v2705 = vrot.slane %v2704, 2
      %v2706 = vrot.slane %v2437, 7
      %v2707 = vrot.slane %v2706, 2
      %v2708 = vrot.slane %v2436, 7
      %v2709 = vrot.slane %v2708, 2
      %v2710 = vrot.slane %v2438, 7
      %v2711 = vrot.slane %v2710, 2
      %v2712 = vrot.slane %v2446, 7
      %v2713 = vrot.slane %v2712, 2
      %v2714 = vrot.slane %v2454, 7
      %v2715 = vrot.slane %v2714, 2
      %v2716 = vrot.slane %v2453, 7
      %v2717 = vrot.slane %v2716, 2
      %v2718 = vrot.slane %v2455, 7
      %v2719 = vrot.slane %v2718, 2
      %v2720 = vrot.slane %v2463, 7
      %v2721 = vrot.slane %v2720, 2
      %v2722 = vrot.slane %v2471, 7
      %v2723 = vrot.slane %v2722, 2
      %v2724 = vrot.slane %v2470, 7
      %v2725 = vrot.slane %v2724, 2
      %v2726 = vrot.slane %v2472, 7
      %v2727 = vrot.slane %v2726, 2
      %v2728 = vrot.slane %v2480, 7
      %v2729 = vrot.slane %v2728, 2
      %v2730 = vrot.slane %v2488, 7
      %v2731 = vrot.slane %v2730, 2
      %v2732 = vrot.slane %v2487, 7
      %v2733 = vrot.slane %v2732, 2
      %v2734 = vrot.slane %v2489, 7
      %v2735 = vrot.slane %v2734, 2
      %v2736 = vrot.slane %v2497, 7
      %v2737 = vrot.slane %v2736, 2
      %v2738 = vrot.slane %v2505, 7
      %v2739 = vrot.slane %v2738, 2
      %v2740 = vrot.slane %v2504, 7
      %v2741 = vrot.slane %v2740, 2
      %v2742 = vrot.slane %v2506, 7
      %v2743 = vrot.slane %v2742, 2
      %v2744 = vrot.slane %v2514, 7
      %v2745 = vrot.slane %v2744, 2
      %v2746 = vrot.slane %v2522, 7
      %v2747 = vrot.slane %v2746, 2
      %v2748 = vrot.slane %v2521, 7
      %v2749 = vrot.slane %v2748, 2
      %v2750 = vrot.slane %v2523, 7
      %v2751 = vrot.slane %v2750, 2
      %v2752 = vrot.slane %v2531, 7
      %v2753 = vrot.slane %v2752, 2
      %v2754 = vrot.slane %v2539, 7
      %v2755 = vrot.slane %v2754, 2
      %v2756 = vrot.slane %v2538, 7
      %v2757 = vrot.slane %v2756, 2
      %v2758 = vrot.slane %v2540, 7
      %v2759 = vrot.slane %v2758, 2
      %v2760 = vrot.slane %v2548, 7
      %v2761 = vrot.slane %v2760, 2
      %v2762 = vrot.slane %v2556, 7
      %v2763 = vrot.slane %v2762, 2
      %v2764 = vrot.slane %v2555, 7
      %v2765 = vrot.slane %v2764, 2
      %v2766 = vrot.slane %v2557, 7
      %v2767 = vrot.slane %v2766, 2
      %v2768 = vrot.slane %v2565, 7
      %v2769 = vrot.slane %v2768, 2
      %v2770 = vrot.slane %v2573, 7
      %v2771 = vrot.slane %v2770, 2
      %v2772 = vrot.slane %v2572, 7
      %v2773 = vrot.slane %v2772, 2
      %v2774 = vrot.slane %v2574, 7
      %v2775 = vrot.slane %v2774, 2
      %v2776 = vrot.slane %v2582, 7
      %v2777 = vrot.slane %v2776, 2
      %v2778 = vrot.slane %v2590, 7
      %v2779 = vrot.slane %v2778, 2
      %v2780 = vrot.slane %v2589, 7
      %v2781 = vrot.slane %v2780, 2
      %v2782 = vrot.slane %v2591, 7
      %v2783 = vrot.slane %v2782, 2
      %v2848 = vmax.f32 %v2327, %v2657
      %v2849 = vmax.f32 %v2335, %v2659
      %v2850 = vmax.f32 %v2334, %v2661
      %v2851 = vmax.f32 %v2336, %v2663
      %v2852 = vmax.f32 %v2344, %v2665
      %v2853 = vmax.f32 %v2352, %v2667
      %v2854 = vmax.f32 %v2351, %v2669
      %v2855 = vmax.f32 %v2353, %v2671
      %v2856 = vmax.f32 %v2361, %v2673
      %v2857 = vmax.f32 %v2369, %v2675
      %v2858 = vmax.f32 %v2368, %v2677
      %v2859 = vmax.f32 %v2370, %v2679
      %v2860 = vmax.f32 %v2378, %v2681
      %v2861 = vmax.f32 %v2386, %v2683
      %v2862 = vmax.f32 %v2385, %v2685
      %v2863 = vmax.f32 %v2387, %v2687
      %v2864 = vmax.f32 %v2395, %v2689
      %v2865 = vmax.f32 %v2403, %v2691
      %v2866 = vmax.f32 %v2402, %v2693
      %v2867 = vmax.f32 %v2404, %v2695
      %v2868 = vmax.f32 %v2412, %v2697
      %v2869 = vmax.f32 %v2420, %v2699
      %v2870 = vmax.f32 %v2419, %v2701
      %v2871 = vmax.f32 %v2421, %v2703
      %v2872 = vmax.f32 %v2429, %v2705
      %v2873 = vmax.f32 %v2437, %v2707
      %v2874 = vmax.f32 %v2436, %v2709
      %v2875 = vmax.f32 %v2438, %v2711
      %v2876 = vmax.f32 %v2446, %v2713
      %v2877 = vmax.f32 %v2454, %v2715
      %v2878 = vmax.f32 %v2453, %v2717
      %v2879 = vmax.f32 %v2455, %v2719
      %v2880 = vmax.f32 %v2463, %v2721
      %v2881 = vmax.f32 %v2471, %v2723
      %v2882 = vmax.f32 %v2470, %v2725
      %v2883 = vmax.f32 %v2472, %v2727
      %v2884 = vmax.f32 %v2480, %v2729
      %v2885 = vmax.f32 %v2488, %v2731
      %v2886 = vmax.f32 %v2487, %v2733
      %v2887 = vmax.f32 %v2489, %v2735
      %v2888 = vmax.f32 %v2497, %v2737
      %v2889 = vmax.f32 %v2505, %v2739
      %v2890 = vmax.f32 %v2504, %v2741
      %v2891 = vmax.f32 %v2506, %v2743
      %v2892 = vmax.f32 %v2514, %v2745
      %v2893 = vmax.f32 %v2522, %v2747
      %v2894 = vmax.f32 %v2521, %v2749
      %v2895 = vmax.f32 %v2523, %v2751
      %v2896 = vmax.f32 %v2531, %v2753
      %v2897 = vmax.f32 %v2539, %v2755
      %v2898 = vmax.f32 %v2538, %v2757
      %v2899 = vmax.f32 %v2540, %v2759
      %v2900 = vmax.f32 %v2548, %v2761
      %v2901 = vmax.f32 %v2556, %v2763
      %v2902 = vmax.f32 %v2555, %v2765
      %v2903 = vmax.f32 %v2557, %v2767
      %v2904 = vmax.f32 %v2565, %v2769
      %v2905 = vmax.f32 %v2573, %v2771
      %v2906 = vmax.f32 %v2572, %v2773
      %v2907 = vmax.f32 %v2574, %v2775
      %v2908 = vmax.f32 %v2582, %v2777
      %v2909 = vmax.f32 %v2590, %v2779
      %v2910 = vmax.f32 %v2589, %v2781
      %v2911 = vmax.f32 %v2591, %v2783
      %v2976 = vlaneseq
      %v2977 = vshrl.u32 %v2976, 7
      %v2978 = vsub.s32 0, %v2977
      %v2979 = vrot.slane %v2848, %v2978
      %v2980 = vlaneseq
      %v2981 = vshrl.u32 %v2980, 7
      %v2982 = vsub.s32 0, %v2981
      %v2983 = vrot.slane %v2849, %v2982
      %v2984 = vlaneseq
      %v2985 = vshrl.u32 %v2984, 7
      %v2986 = vsub.s32 0, %v2985
      %v2987 = vrot.slane %v2850, %v2986
      %v2988 = vlaneseq
      %v2989 = vshrl.u32 %v2988, 7
      %v2990 = vsub.s32 0, %v2989
      %v2991 = vrot.slane %v2851, %v2990
      %v2992 = vlaneseq
      %v2993 = vshrl.u32 %v2992, 7
      %v2994 = vsub.s32 0, %v2993
      %v2995 = vrot.slane %v2852, %v2994
      %v2996 = vlaneseq
      %v2997 = vshrl.u32 %v2996, 7
      %v2998 = vsub.s32 0, %v2997
      %v2999 = vrot.slane %v2853, %v2998
      %v3000 = vlaneseq
      %v3001 = vshrl.u32 %v3000, 7
      %v3002 = vsub.s32 0, %v3001
      %v3003 = vrot.slane %v2854, %v3002
      %v3004 = vlaneseq
      %v3005 = vshrl.u32 %v3004, 7
      %v3006 = vsub.s32 0, %v3005
      %v3007 = vrot.slane %v2855, %v3006
      %v3008 = vlaneseq
      %v3009 = vshrl.u32 %v3008, 7
      %v3010 = vsub.s32 0, %v3009
      %v3011 = vrot.slane %v2856, %v3010
      %v3012 = vlaneseq
      %v3013 = vshrl.u32 %v3012, 7
      %v3014 = vsub.s32 0, %v3013
      %v3015 = vrot.slane %v2857, %v3014
      %v3016 = vlaneseq
      %v3017 = vshrl.u32 %v3016, 7
      %v3018 = vsub.s32 0, %v3017
      %v3019 = vrot.slane %v2858, %v3018
      %v3020 = vlaneseq
      %v3021 = vshrl.u32 %v3020, 7
      %v3022 = vsub.s32 0, %v3021
      %v3023 = vrot.slane %v2859, %v3022
      %v3024 = vlaneseq
      %v3025 = vshrl.u32 %v3024, 7
      %v3026 = vsub.s32 0, %v3025
      %v3027 = vrot.slane %v2860, %v3026
      %v3028 = vlaneseq
      %v3029 = vshrl.u32 %v3028, 7
      %v3030 = vsub.s32 0, %v3029
      %v3031 = vrot.slane %v2861, %v3030
      %v3032 = vlaneseq
      %v3033 = vshrl.u32 %v3032, 7
      %v3034 = vsub.s32 0, %v3033
      %v3035 = vrot.slane %v2862, %v3034
      %v3036 = vlaneseq
      %v3037 = vshrl.u32 %v3036, 7
      %v3038 = vsub.s32 0, %v3037
      %v3039 = vrot.slane %v2863, %v3038
      %v3040 = vlaneseq
      %v3041 = vshrl.u32 %v3040, 7
      %v3042 = vsub.s32 0, %v3041
      %v3043 = vrot.slane %v2864, %v3042
      %v3044 = vlaneseq
      %v3045 = vshrl.u32 %v3044, 7
      %v3046 = vsub.s32 0, %v3045
      %v3047 = vrot.slane %v2865, %v3046
      %v3048 = vlaneseq
      %v3049 = vshrl.u32 %v3048, 7
      %v3050 = vsub.s32 0, %v3049
      %v3051 = vrot.slane %v2866, %v3050
      %v3052 = vlaneseq
      %v3053 = vshrl.u32 %v3052, 7
      %v3054 = vsub.s32 0, %v3053
      %v3055 = vrot.slane %v2867, %v3054
      %v3056 = vlaneseq
      %v3057 = vshrl.u32 %v3056, 7
      %v3058 = vsub.s32 0, %v3057
      %v3059 = vrot.slane %v2868, %v3058
      %v3060 = vlaneseq
      %v3061 = vshrl.u32 %v3060, 7
      %v3062 = vsub.s32 0, %v3061
      %v3063 = vrot.slane %v2869, %v3062
      %v3064 = vlaneseq
      %v3065 = vshrl.u32 %v3064, 7
      %v3066 = vsub.s32 0, %v3065
      %v3067 = vrot.slane %v2870, %v3066
      %v3068 = vlaneseq
      %v3069 = vshrl.u32 %v3068, 7
      %v3070 = vsub.s32 0, %v3069
      %v3071 = vrot.slane %v2871, %v3070
      %v3072 = vlaneseq
      %v3073 = vshrl.u32 %v3072, 7
      %v3074 = vsub.s32 0, %v3073
      %v3075 = vrot.slane %v2872, %v3074
      %v3076 = vlaneseq
      %v3077 = vshrl.u32 %v3076, 7
      %v3078 = vsub.s32 0, %v3077
      %v3079 = vrot.slane %v2873, %v3078
      %v3080 = vlaneseq
      %v3081 = vshrl.u32 %v3080, 7
      %v3082 = vsub.s32 0, %v3081
      %v3083 = vrot.slane %v2874, %v3082
      %v3084 = vlaneseq
      %v3085 = vshrl.u32 %v3084, 7
      %v3086 = vsub.s32 0, %v3085
      %v3087 = vrot.slane %v2875, %v3086
      %v3088 = vlaneseq
      %v3089 = vshrl.u32 %v3088, 7
      %v3090 = vsub.s32 0, %v3089
      %v3091 = vrot.slane %v2876, %v3090
      %v3092 = vlaneseq
      %v3093 = vshrl.u32 %v3092, 7
      %v3094 = vsub.s32 0, %v3093
      %v3095 = vrot.slane %v2877, %v3094
      %v3096 = vlaneseq
      %v3097 = vshrl.u32 %v3096, 7
      %v3098 = vsub.s32 0, %v3097
      %v3099 = vrot.slane %v2878, %v3098
      %v3100 = vlaneseq
      %v3101 = vshrl.u32 %v3100, 7
      %v3102 = vsub.s32 0, %v3101
      %v3103 = vrot.slane %v2879, %v3102
      %v3104 = vlaneseq
      %v3105 = vshrl.u32 %v3104, 7
      %v3106 = vsub.s32 0, %v3105
      %v3107 = vrot.slane %v2880, %v3106
      %v3108 = vlaneseq
      %v3109 = vshrl.u32 %v3108, 7
      %v3110 = vsub.s32 0, %v3109
      %v3111 = vrot.slane %v2881, %v3110
      %v3112 = vlaneseq
      %v3113 = vshrl.u32 %v3112, 7
      %v3114 = vsub.s32 0, %v3113
      %v3115 = vrot.slane %v2882, %v3114
      %v3116 = vlaneseq
      %v3117 = vshrl.u32 %v3116, 7
      %v3118 = vsub.s32 0, %v3117
      %v3119 = vrot.slane %v2883, %v3118
      %v3120 = vlaneseq
      %v3121 = vshrl.u32 %v3120, 7
      %v3122 = vsub.s32 0, %v3121
      %v3123 = vrot.slane %v2884, %v3122
      %v3124 = vlaneseq
      %v3125 = vshrl.u32 %v3124, 7
      %v3126 = vsub.s32 0, %v3125
      %v3127 = vrot.slane %v2885, %v3126
      %v3128 = vlaneseq
      %v3129 = vshrl.u32 %v3128, 7
      %v3130 = vsub.s32 0, %v3129
      %v3131 = vrot.slane %v2886, %v3130
      %v3132 = vlaneseq
      %v3133 = vshrl.u32 %v3132, 7
      %v3134 = vsub.s32 0, %v3133
      %v3135 = vrot.slane %v2887, %v3134
      %v3136 = vlaneseq
      %v3137 = vshrl.u32 %v3136, 7
      %v3138 = vsub.s32 0, %v3137
      %v3139 = vrot.slane %v2888, %v3138
      %v3140 = vlaneseq
      %v3141 = vshrl.u32 %v3140, 7
      %v3142 = vsub.s32 0, %v3141
      %v3143 = vrot.slane %v2889, %v3142
      %v3144 = vlaneseq
      %v3145 = vshrl.u32 %v3144, 7
      %v3146 = vsub.s32 0, %v3145
      %v3147 = vrot.slane %v2890, %v3146
      %v3148 = vlaneseq
      %v3149 = vshrl.u32 %v3148, 7
      %v3150 = vsub.s32 0, %v3149
      %v3151 = vrot.slane %v2891, %v3150
      %v3152 = vlaneseq
      %v3153 = vshrl.u32 %v3152, 7
      %v3154 = vsub.s32 0, %v3153
      %v3155 = vrot.slane %v2892, %v3154
      %v3156 = vlaneseq
      %v3157 = vshrl.u32 %v3156, 7
      %v3158 = vsub.s32 0, %v3157
      %v3159 = vrot.slane %v2893, %v3158
      %v3160 = vlaneseq
      %v3161 = vshrl.u32 %v3160, 7
      %v3162 = vsub.s32 0, %v3161
      %v3163 = vrot.slane %v2894, %v3162
      %v3164 = vlaneseq
      %v3165 = vshrl.u32 %v3164, 7
      %v3166 = vsub.s32 0, %v3165
      %v3167 = vrot.slane %v2895, %v3166
      %v3168 = vlaneseq
      %v3169 = vshrl.u32 %v3168, 7
      %v3170 = vsub.s32 0, %v3169
      %v3171 = vrot.slane %v2896, %v3170
      %v3172 = vlaneseq
      %v3173 = vshrl.u32 %v3172, 7
      %v3174 = vsub.s32 0, %v3173
      %v3175 = vrot.slane %v2897, %v3174
      %v3176 = vlaneseq
      %v3177 = vshrl.u32 %v3176, 7
      %v3178 = vsub.s32 0, %v3177
      %v3179 = vrot.slane %v2898, %v3178
      %v3180 = vlaneseq
      %v3181 = vshrl.u32 %v3180, 7
      %v3182 = vsub.s32 0, %v3181
      %v3183 = vrot.slane %v2899, %v3182
      %v3184 = vlaneseq
      %v3185 = vshrl.u32 %v3184, 7
      %v3186 = vsub.s32 0, %v3185
      %v3187 = vrot.slane %v2900, %v3186
      %v3188 = vlaneseq
      %v3189 = vshrl.u32 %v3188, 7
      %v3190 = vsub.s32 0, %v3189
      %v3191 = vrot.slane %v2901, %v3190
      %v3192 = vlaneseq
      %v3193 = vshrl.u32 %v3192, 7
      %v3194 = vsub.s32 0, %v3193
      %v3195 = vrot.slane %v2902, %v3194
      %v3196 = vlaneseq
      %v3197 = vshrl.u32 %v3196, 7
      %v3198 = vsub.s32 0, %v3197
      %v3199 = vrot.slane %v2903, %v3198
      %v3200 = vlaneseq
      %v3201 = vshrl.u32 %v3200, 7
      %v3202 = vsub.s32 0, %v3201
      %v3203 = vrot.slane %v2904, %v3202
      %v3204 = vlaneseq
      %v3205 = vshrl.u32 %v3204, 7
      %v3206 = vsub.s32 0, %v3205
      %v3207 = vrot.slane %v2905, %v3206
      %v3208 = vlaneseq
      %v3209 = vshrl.u32 %v3208, 7
      %v3210 = vsub.s32 0, %v3209
      %v3211 = vrot.slane %v2906, %v3210
      %v3212 = vlaneseq
      %v3213 = vshrl.u32 %v3212, 7
      %v3214 = vsub.s32 0, %v3213
      %v3215 = vrot.slane %v2907, %v3214
      %v3216 = vlaneseq
      %v3217 = vshrl.u32 %v3216, 7
      %v3218 = vsub.s32 0, %v3217
      %v3219 = vrot.slane %v2908, %v3218
      %v3220 = vlaneseq
      %v3221 = vshrl.u32 %v3220, 7
      %v3222 = vsub.s32 0, %v3221
      %v3223 = vrot.slane %v2909, %v3222
      %v3224 = vlaneseq
      %v3225 = vshrl.u32 %v3224, 7
      %v3226 = vsub.s32 0, %v3225
      %v3227 = vrot.slane %v2910, %v3226
      %v3228 = vlaneseq
      %v3229 = vshrl.u32 %v3228, 7
      %v3230 = vsub.s32 0, %v3229
      %v3231 = vrot.slane %v2911, %v3230
      %vm3232 = vcmask 1041409
      %v3233 = vsel %vm3232, %v2983, %v2979
      %vm3234 = vcmask 1042434
      %v3235 = vsel %vm3234, %v2987, %v3233
      %vm3236 = vcmask 1043459
      %v3237 = vsel %vm3236, %v2991, %v3235
      %vm3238 = vcmask 1044484
      %v3239 = vsel %vm3238, %v2995, %v3237
      %vm3240 = vcmask 1045509
      %v3241 = vsel %vm3240, %v2999, %v3239
      %vm3242 = vcmask 1046534
      %v3243 = vsel %vm3242, %v3003, %v3241
      %vm3244 = vcmask 1047559
      %v3245 = vsel %vm3244, %v3007, %v3243
      %v3246 = vsel %vm3232, %v3015, %v3011
      %v3247 = vsel %vm3234, %v3019, %v3246
      %v3248 = vsel %vm3236, %v3023, %v3247
      %v3249 = vsel %vm3238, %v3027, %v3248
      %v3250 = vsel %vm3240, %v3031, %v3249
      %v3251 = vsel %vm3242, %v3035, %v3250
      %v3252 = vsel %vm3244, %v3039, %v3251
      %v3253 = vsel %vm3232, %v3047, %v3043
      %v3254 = vsel %vm3234, %v3051, %v3253
      %v3255 = vsel %vm3236, %v3055, %v3254
      %v3256 = vsel %vm3238, %v3059, %v3255
      %v3257 = vsel %vm3240, %v3063, %v3256
      %v3258 = vsel %vm3242, %v3067, %v3257
      %v3259 = vsel %vm3244, %v3071, %v3258
      %v3260 = vsel %vm3232, %v3079, %v3075
      %v3261 = vsel %vm3234, %v3083, %v3260
      %v3262 = vsel %vm3236, %v3087, %v3261
      %v3263 = vsel %vm3238, %v3091, %v3262
      %v3264 = vsel %vm3240, %v3095, %v3263
      %v3265 = vsel %vm3242, %v3099, %v3264
      %v3266 = vsel %vm3244, %v3103, %v3265
      %v3267 = vsel %vm3232, %v3111, %v3107
      %v3268 = vsel %vm3234, %v3115, %v3267
      %v3269 = vsel %vm3236, %v3119, %v3268
      %v3270 = vsel %vm3238, %v3123, %v3269
      %v3271 = vsel %vm3240, %v3127, %v3270
      %v3272 = vsel %vm3242, %v3131, %v3271
      %v3273 = vsel %vm3244, %v3135, %v3272
      %v3274 = vsel %vm3232, %v3143, %v3139
      %v3275 = vsel %vm3234, %v3147, %v3274
      %v3276 = vsel %vm3236, %v3151, %v3275
      %v3277 = vsel %vm3238, %v3155, %v3276
      %v3278 = vsel %vm3240, %v3159, %v3277
      %v3279 = vsel %vm3242, %v3163, %v3278
      %v3280 = vsel %vm3244, %v3167, %v3279
      %v3281 = vsel %vm3232, %v3175, %v3171
      %v3282 = vsel %vm3234, %v3179, %v3281
      %v3283 = vsel %vm3236, %v3183, %v3282
      %v3284 = vsel %vm3238, %v3187, %v3283
      %v3285 = vsel %vm3240, %v3191, %v3284
      %v3286 = vsel %vm3242, %v3195, %v3285
      %v3287 = vsel %vm3244, %v3199, %v3286
      %v3288 = vsel %vm3232, %v3207, %v3203
      %v3289 = vsel %vm3234, %v3211, %v3288
      %v3290 = vsel %vm3236, %v3215, %v3289
      %v3291 = vsel %vm3238, %v3219, %v3290
      %v3292 = vsel %vm3240, %v3223, %v3291
      %v3293 = vsel %vm3242, %v3227, %v3292
      %v3294 = vsel %vm3244, %v3231, %v3293
      %3303 = vst.msk [vmem:[%s197] sm:$0xff] %vm1665, %v3245
      %3304 = vst.msk [vmem:[%s197 + $0x8] sm:$0xff] %vm1665, %v3252
      %3305 = vst.msk [vmem:[%s197 + $0x10] sm:$0xff] %vm1665, %v3259
      %3306 = vst.msk [vmem:[%s197 + $0x18] sm:$0xff] %vm1665, %v3266
      %3307 = vst.msk [vmem:[%s197 + $0x20] sm:$0xff] %vm1665, %v3273
      %3308 = vst.msk [vmem:[%s197 + $0x28] sm:$0xff] %vm1665, %v3280
      %3309 = vst.msk [vmem:[%s197 + $0x30] sm:$0xff] %vm1665, %v3287
      %3310 = vst.msk [vmem:[%s197 + $0x38] sm:$0xff] %vm1665, %v3294
      %p3311 = scmp.lt.s32.totalorder %s15, 1
      %s3312 = scalar_select %p3311, %s15, 1
      %s3313 = smul.addr %s3312, 8
      %s3314 = smul.addr %s3313, 8
      %s3315 = scalar_lea.vmem %s4, %s3314
      // Predicated region
      $region37: #{darknet_tiny_block.1} parent=35 // pred_check
        %p3316 = pneg %p122
      $region38: #{darknet_tiny_block.1} parent=35 // pred_check_branch
        %3318 = sbr.rel (%p3316) target = $region40
      $region39: #{darknet_tiny_block.1} parent=35 // pred_region
        _
      $region40: #{darknet_tiny_block.1} parent=35 // pred_fallthru
        _
    $region36: #{darknet_tiny_block.1} parent=5 // pred_fallthru
      _
    %p3319 = scmp.le.s32.totalorder 2, %s10
    // Predicated region
    $region41: #{darknet_tiny_block.1} parent=5 // pred_check
      %p3320 = pneg %p3319
    $region42: #{darknet_tiny_block.1} parent=5 // pred_check_branch
      %3322 = sbr.rel (%p3320) target = $region44
    $region43: #{darknet_tiny_block.1} parent=5 // pred_region
      %s3323 = ssub.s32 %s10, 2
      // Predicated region
      $region45: #{darknet_tiny_block.1} parent=43 // pred_check
        %p3324 = pneg %p128
      $region46: #{darknet_tiny_block.1} parent=43 // pred_check_branch
        %3326 = sbr.rel (%p3324) target = $region48
      $region47: #{darknet_tiny_block.1} parent=43 // pred_region
        %p3327 = scmp.lt.s32.totalorder %s16, 1
        %s3328 = scalar_select %p3327, %s16, 1
        %s3329 = smul.addr %s3328, 8
        %s3330 = smul.addr %s3329, 8
        %s3331 = scalar_lea.vmem %s4, %s3330
      $region48: #{darknet_tiny_block.1} parent=43 // pred_fallthru
        _
    $region44: #{darknet_tiny_block.1} parent=5 // pred_fallthru
      _
  $region6: #{darknet_tiny_block.1} parent=0 // loop_footer
    %s14 = sadd.s32 1, %s10
  $region7: #{darknet_tiny_block.1} parent=0 // loop_footer_branch
    %9 = sbr.rel target = $region3
  $region8: #{darknet_tiny_block.1} parent=0 // loop_exit
    _

</llo_original>
